<compile_context>
chip_gen: v5e
topology: v5e:2x2
jax: 0.10.0
libtpu: 0.0.40
codegen_flags: <defaults>
</compile_context>

<pallas_src>
import functools
import math

import jax
import jax.numpy as jnp
from jax import lax
from jax.experimental import pallas as pl
from jax.experimental.pallas import tpu as pltpu

# ----------------------------- small synthetic config -----------------------------
VOCAB = 64
DIM = 32
N_LAYERS = 2
N_HEADS = 4
N_KV_HEADS = 2
HEAD_DIM = DIM // N_HEADS          # 8
HIDDEN = 64                        # FFN hidden dim
EPS = 1e-5
ROPE_THETA = 10000.0

BATCH = 2
SEQ = 8


# ----------------------------------- kernel helpers ---------------------------------
def _rmsnorm_f32(x, w):
    ms = jnp.mean(x * x, axis=-1, keepdims=True)
    return x * lax.rsqrt(ms + EPS) * w


def _softmax_rows_f32(s):
    m = jnp.max(s, axis=-1, keepdims=True)
    e = jnp.exp(s - m)
    denom = jnp.sum(e, axis=-1, keepdims=True)
    # divide on the EUP slot instead of VALU
    return e * pl.reciprocal(denom, approx=True)


# ----------------------------------- kernels ---------------------------------------
def _layer_kernel(x_ref, an_ref, wq_ref, wk_ref, wv_ref, wo_ref,
                  fn_ref, w1_ref, w3_ref, w2_ref, cos_ref, sin_ref,
                  o_ref, *, n_heads, n_kv_heads, head_dim):
    """One batch element per grid step. Fully fused decoder layer:
    RMSNorm + QKV + RoPE + GQA attention + Wo + residual + RMSNorm + SwiGLU + residual."""
    x = x_ref[...].astype(jnp.float32)                        # (S, D)
    S, _ = x.shape
    half = head_dim // 2
    rep = n_heads // n_kv_heads
    G = n_kv_heads
    scale = 1.0 / math.sqrt(head_dim)

    # -------- attention sub-block --------
    h = _rmsnorm_f32(x, an_ref[...].astype(jnp.float32)).astype(jnp.bfloat16)

    q = jnp.dot(h, wq_ref[...], preferred_element_type=jnp.float32)   # (S, H*hd)
    k = jnp.dot(h, wk_ref[...], preferred_element_type=jnp.float32)   # (S, G*hd)
    v = jnp.dot(h, wv_ref[...], preferred_element_type=jnp.float32)   # (S, G*hd)

    cos = cos_ref[...].astype(jnp.float32)[:, None, :]        # (S, 1, hd) full-width table
    sin = sin_ref[...].astype(jnp.float32)[:, None, :]

    def rope(t):                                              # t: (S, nh, hd) -- one call for
        t1 = t[..., :half]                                    # ALL heads, not per-head slices
        t2 = t[..., half:]
        rot = jnp.concatenate([-t2, t1], axis=-1)
        return t * cos + rot * sin

    q3 = rope(q.reshape(S, n_heads, head_dim))                # (S, H, hd)
    k3 = rope(k.reshape(S, n_kv_heads, head_dim))             # (S, G, hd)
    v3 = v.reshape(S, n_kv_heads, head_dim)                   # (S, G, hd)

    # GQA head stacking: KV-group is the batch dim, the `rep` query heads of a group are
    # stacked along M. No repeated KV, no per-head matmuls.
    q_g = jnp.transpose(q3, (1, 0, 2)).reshape(G, rep * S, head_dim)   # (G, rep*S, hd)
    k_g = jnp.transpose(k3, (1, 0, 2))                                 # (G, S, hd)
    v_g = jnp.transpose(v3, (1, 0, 2))                                 # (G, S, hd)

    s = jnp.einsum('gmd,gnd->gmn',
                   (q_g * scale).astype(jnp.bfloat16),
                   k_g.astype(jnp.bfloat16),
                   preferred_element_type=jnp.float32)                 # (G, rep*S, S)

    qpos = lax.broadcasted_iota(jnp.int32, (rep, S, S), 1).reshape(1, rep * S, S)
    kpos = lax.broadcasted_iota(jnp.int32, (rep, S, S), 2).reshape(1, rep * S, S)
    s = jnp.where(kpos <= qpos, s, -1e30)                              # finite causal mask

    p = _softmax_rows_f32(s)                                           # f32 softmax
    og = jnp.einsum('gmn,gnd->gmd', p.astype(jnp.bfloat16),
                    v_g.astype(jnp.bfloat16),
                    preferred_element_type=jnp.float32)                # (G, rep*S, hd)

    # back to (S, H*hd) in head-major column order matching wo, then one Wo matmul
    attn = jnp.transpose(og.reshape(n_heads, S, head_dim), (1, 0, 2))
    attn = attn.reshape(S, n_heads * head_dim).astype(jnp.bfloat16)
    attn_o = jnp.dot(attn, wo_ref[...], preferred_element_type=jnp.float32)   # (S, D)

    x1 = x + attn_o                                            # f32-resident residual

    # -------- FFN sub-block --------
    h2 = _rmsnorm_f32(x1, fn_ref[...].astype(jnp.float32)).astype(jnp.bfloat16)
    h1 = jnp.dot(h2, w1_ref[...], preferred_element_type=jnp.float32)  # (S, HIDDEN)
    h3 = jnp.dot(h2, w3_ref[...], preferred_element_type=jnp.float32)  # (S, HIDDEN)
    g = (h1 * jax.nn.sigmoid(h1) * h3).astype(jnp.bfloat16)            # SiLU in f32
    ffn_o = jnp.dot(g, w2_ref[...], preferred_element_type=jnp.float32)  # (S, D)

    o_ref[...] = (x1 + ffn_o).astype(o_ref.dtype)


def _head_kernel(x_ref, wn_ref, wo_ref, o_ref):
    """Fused: final RMSNorm + LM head projection (one batch element per grid step)."""
    x = x_ref[...].astype(jnp.float32)
    h = _rmsnorm_f32(x, wn_ref[...].astype(jnp.float32)).astype(jnp.bfloat16)
    o_ref[...] = jnp.dot(h, wo_ref[...],
                         preferred_element_type=jnp.float32).astype(o_ref.dtype)


# ------------------------------- pallas_call wrappers --------------------------------
def mistral_layer(x, p, cos_full, sin_full):
    """x: (B, S, D) bf16 residual stream -> (B, S, D) bf16 (updated in place via aliasing)."""
    B, S, D = x.shape
    QD = N_HEADS * HEAD_DIM
    KVD = N_KV_HEADS * HEAD_DIM
    H = HIDDEN
    kernel = functools.partial(_layer_kernel, n_heads=N_HEADS,
                               n_kv_heads=N_KV_HEADS, head_dim=HEAD_DIM)
    return pl.pallas_call(
        kernel,
        out_shape=jax.ShapeDtypeStruct((B, S, D), x.dtype),
        grid=(B,),
        in_specs=[
            pl.BlockSpec((None, S, D), lambda b: (b, 0, 0)),    # x (per batch element)
            pl.BlockSpec((1, D), lambda b: (0, 0)),             # attn_norm
            pl.BlockSpec((D, QD), lambda b: (0, 0)),            # wq
            pl.BlockSpec((D, KVD), lambda b: (0, 0)),           # wk
            pl.BlockSpec((D, KVD), lambda b: (0, 0)),           # wv
            pl.BlockSpec((QD, D), lambda b: (0, 0)),            # wo
            pl.BlockSpec((1, D), lambda b: (0, 0)),             # ffn_norm
            pl.BlockSpec((D, H), lambda b: (0, 0)),             # w1
            pl.BlockSpec((D, H), lambda b: (0, 0)),             # w3
            pl.BlockSpec((H, D), lambda b: (0, 0)),             # w2
            pl.BlockSpec((S, HEAD_DIM), lambda b: (0, 0)),      # cos (full width)
            pl.BlockSpec((S, HEAD_DIM), lambda b: (0, 0)),      # sin (full width)
        ],
        out_specs=pl.BlockSpec((None, S, D), lambda b: (b, 0, 0)),
        input_output_aliases={0: 0},                            # residual updated in place
        compiler_params=pltpu.CompilerParams(dimension_semantics=("parallel",)),
    )(x, p["attn_norm"].reshape(1, D), p["wq"], p["wk"], p["wv"], p["wo"],
      p["ffn_norm"].reshape(1, D), p["w1"], p["w3"], p["w2"], cos_full, sin_full)


def lm_head(x, norm_w, out_w):
    """x: (B, S, D) bf16 -> (B, S, V) f32 logits."""
    B, S, D = x.shape
    V = out_w.shape[1]
    return pl.pallas_call(
        _head_kernel,
        out_shape=jax.ShapeDtypeStruct((B, S, V), jnp.float32),
        grid=(B,),
        in_specs=[
            pl.BlockSpec((None, S, D), lambda b: (b, 0, 0)),
            pl.BlockSpec((1, D), lambda b: (0, 0)),
            pl.BlockSpec((D, V), lambda b: (0, 0)),
        ],
        out_specs=pl.BlockSpec((None, S, V), lambda b: (b, 0, 0)),
        compiler_params=pltpu.CompilerParams(dimension_semantics=("parallel",)),
    )(x, norm_w.reshape(1, D), out_w)


# ------------------------------------ glue ------------------------------------------
def rope_tables(seq_len, head_dim, theta=ROPE_THETA):
    """Full-width (S, head_dim) cos/sin tables for rotate-half RoPE applied whole-tensor."""
    half = head_dim // 2
    inv_freq = 1.0 / (theta ** (jnp.arange(0, half, dtype=jnp.float32) / half))
    pos = jnp.arange(seq_len, dtype=jnp.float32)
    ang = pos[:, None] * inv_freq[None, :]                      # (S, half)
    cos = jnp.cos(ang)
    sin = jnp.sin(ang)
    return (jnp.concatenate([cos, cos], axis=-1),
            jnp.concatenate([sin, sin], axis=-1))


def mistral_forward(tokens, params):
    B, S = tokens.shape
    cos_full, sin_full = rope_tables(S, HEAD_DIM)
    # TODO(synk): embedding gather stays in plain JAX (no clean tiny-Pallas gather here).
    x = jnp.take(params["embedding"], tokens, axis=0)           # (B, S, DIM) bf16
    for p in params["layers"]:
        x = mistral_layer(x, p, cos_full, sin_full)             # fused attention + FFN
    logits = lm_head(x, params["norm"], params["out_w"])        # final norm + LM head
    return logits


mistral_forward_jit = jax.jit(mistral_forward)


# --------------------------------- parameters ----------------------------------------
def init_params(key):
    def dense(k, shape, fan_in):
        return (jax.random.normal(k, shape, jnp.float32)
                / math.sqrt(fan_in)).astype(jnp.bfloat16)

    keys = jax.random.split(key, 2 + 8 * N_LAYERS)
    ki = iter(keys)
    params = {
        "embedding": dense(next(ki), (VOCAB, DIM), DIM),
        "norm": jnp.ones((DIM,), jnp.float32),
        "out_w": dense(next(ki), (DIM, VOCAB), DIM),
        "layers": [],
    }
    for _ in range(N_LAYERS):
        layer = {
            "attn_norm": jnp.ones((DIM,), jnp.float32),
            "ffn_norm": jnp.ones((DIM,), jnp.float32),
            "wq": dense(next(ki), (DIM, N_HEADS * HEAD_DIM), DIM),
            "wk": dense(next(ki), (DIM, N_KV_HEADS * HEAD_DIM), DIM),
            "wv": dense(next(ki), (DIM, N_KV_HEADS * HEAD_DIM), DIM),
            "wo": dense(next(ki), (N_HEADS * HEAD_DIM, DIM), DIM),
            "w1": dense(next(ki), (DIM, HIDDEN), DIM),
            "w3": dense(next(ki), (DIM, HIDDEN), DIM),
            "w2": dense(next(ki), (HIDDEN, DIM), HIDDEN),
        }
        params["layers"].append(layer)
    return params


# ------------------------------------- main -------------------------------------------
if __name__ == "__main__":
    key = jax.random.PRNGKey(0)
    pkey, tkey = jax.random.split(key)
    params = init_params(pkey)
    tokens = jax.random.randint(tkey, (BATCH, SEQ), 0, VOCAB, dtype=jnp.int32)

    logits = mistral_forward_jit(tokens, params)
    logits = jax.block_until_ready(logits)

    assert logits.shape == (BATCH, SEQ, VOCAB)
    assert bool(jnp.all(jnp.isfinite(logits)))
    print("KERNEL_OK")
</pallas_src>

<mosaic_0001>
module attributes {stable_mosaic.version = 11 : i64} {
  func.func @_head_kernel(%arg0: i32, %arg1: memref<1x8x32xbf16, #tpu.memory_space<vmem>>, %arg2: memref<1x32xf32, #tpu.memory_space<vmem>>, %arg3: memref<32x64xbf16, #tpu.memory_space<vmem>>, %arg4: memref<1x8x64xf32, #tpu.memory_space<vmem>>) attributes {dimension_semantics = [#tpu.dimension_semantics<parallel>], iteration_bounds = array<i64: 2>, scalar_prefetch = 0 : i64, scratch_operands = 0 : i64, tpu.core_type = #tpu.core_type<tc>, window_params = [{transform_indices = @transform_0, window_bounds = array<i64: 1, 8, 32>}, {pipeline_mode = #tpu.pipeline_mode<synchronous>, transform_indices = @transform_1, window_bounds = array<i64: 1, 32>}, {pipeline_mode = #tpu.pipeline_mode<synchronous>, transform_indices = @transform_2, window_bounds = array<i64: 32, 64>}, {transform_indices = @transform_3, window_bounds = array<i64: 1, 8, 64>}]} {
    %c0 = arith.constant 0 : index
    %c0_0 = arith.constant 0 : index
    %c0_1 = arith.constant 0 : index
    %0 = vector.load %arg1[%c0, %c0_0, %c0_1] : memref<1x8x32xbf16, #tpu.memory_space<vmem>>, vector<1x8x32xbf16>
    %1 = vector.shape_cast %0 : vector<1x8x32xbf16> to vector<8x32xbf16>
    %2 = arith.extf %1 : vector<8x32xbf16> to vector<8x32xf32>
    %c0_2 = arith.constant 0 : index
    %c0_3 = arith.constant 0 : index
    %3 = vector.load %arg2[%c0_2, %c0_3] : memref<1x32xf32, #tpu.memory_space<vmem>>, vector<1x32xf32>
    %4 = arith.mulf %2, %2 : vector<8x32xf32>
    %cst = arith.constant dense<0.000000e+00> : vector<8xf32>
    %5 = vector.multi_reduction <add>, %4, %cst [1] : vector<8x32xf32> to vector<8xf32>
    %6 = vector.shape_cast %5 : vector<8xf32> to vector<8x1xf32>
    %cst_4 = arith.constant 3.200000e+01 : f32
    %7 = vector.broadcast %cst_4 : f32 to vector<8x1xf32>
    %8 = arith.divf %6, %7 : vector<8x1xf32>
    %cst_5 = arith.constant 9.99999974E-6 : f32
    %9 = vector.broadcast %cst_5 : f32 to vector<8x1xf32>
    %10 = arith.addf %8, %9 : vector<8x1xf32>
    %11 = math.rsqrt %10 : vector<8x1xf32>
    %12 = vector.broadcast %11 : vector<8x1xf32> to vector<8x32xf32>
    %13 = arith.mulf %2, %12 : vector<8x32xf32>
    %14 = vector.broadcast %3 : vector<1x32xf32> to vector<8x32xf32>
    %15 = arith.mulf %13, %14 : vector<8x32xf32>
    %16 = arith.truncf %15 : vector<8x32xf32> to vector<8x32xbf16>
    %c0_6 = arith.constant 0 : index
    %c0_7 = arith.constant 0 : index
    %17 = vector.load %arg3[%c0_6, %c0_7] : memref<32x64xbf16, #tpu.memory_space<vmem>>, vector<32x64xbf16>
    %cst_8 = arith.constant dense<0.000000e+00> : vector<8x64xf32>
    %18 = tpu.matmul %16, %17, %cst_8 {dimension_numbers = #tpu.dot_dimension_numbers<[1], [0], [0], [1], [0, 0, 1, 1], [], []>} : vector<8x32xbf16>, vector<32x64xbf16>, vector<8x64xf32> -> vector<8x64xf32>
    %c0_9 = arith.constant 0 : index
    %c0_10 = arith.constant 0 : index
    %c0_11 = arith.constant 0 : index
    %19 = vector.load %arg4[%c0_9, %c0_10, %c0_11] : memref<1x8x64xf32, #tpu.memory_space<vmem>>, vector<1x8x64xf32>
    %20 = vector.shape_cast %19 : vector<1x8x64xf32> to vector<8x64xf32>
    %21 = vector.shape_cast %18 : vector<8x64xf32> to vector<1x8x64xf32>
    tpu.vector_store %arg4[%c0_9, %c0_10, %c0_11], %21 {strides = array<i32>} : memref<1x8x64xf32, #tpu.memory_space<vmem>>, vector<1x8x64xf32>,
    return
  }
  func.func @transform_0(%arg0: i32) -> (i32, i32, i32) {
    %c0_i32 = arith.constant 0 : i32
    %c0_i32_0 = arith.constant 0 : i32
    %c0_i32_1 = arith.constant 0 : i32
    return %arg0, %c0_i32, %c0_i32_0 : i32, i32, i32
  }
  func.func @transform_1(%arg0: i32) -> (i32, i32) {
    %c0_i32 = arith.constant 0 : i32
    %c0_i32_0 = arith.constant 0 : i32
    %c0_i32_1 = arith.constant 0 : i32
    return %c0_i32, %c0_i32_0 : i32, i32
  }
  func.func @transform_2(%arg0: i32) -> (i32, i32) {
    %c0_i32 = arith.constant 0 : i32
    %c0_i32_0 = arith.constant 0 : i32
    %c0_i32_1 = arith.constant 0 : i32
    return %c0_i32, %c0_i32_0 : i32, i32
  }
  func.func @transform_3(%arg0: i32) -> (i32, i32, i32) {
    %c0_i32 = arith.constant 0 : i32
    %c0_i32_0 = arith.constant 0 : i32
    %c0_i32_1 = arith.constant 0 : i32
    return %arg0, %c0_i32, %c0_i32_0 : i32, i32, i32
  }
}

module attributes {stable_mosaic.version = 11 : i64} {
  func.func @_layer_kernel(%arg0: i32, %arg1: memref<1x8x32xbf16, #tpu.memory_space<vmem>>, %arg2: memref<1x32xf32, #tpu.memory_space<vmem>>, %arg3: memref<32x32xbf16, #tpu.memory_space<vmem>>, %arg4: memref<32x16xbf16, #tpu.memory_space<vmem>>, %arg5: memref<32x16xbf16, #tpu.memory_space<vmem>>, %arg6: memref<32x32xbf16, #tpu.memory_space<vmem>>, %arg7: memref<1x32xf32, #tpu.memory_space<vmem>>, %arg8: memref<32x64xbf16, #tpu.memory_space<vmem>>, %arg9: memref<32x64xbf16, #tpu.memory_space<vmem>>, %arg10: memref<64x32xbf16, #tpu.memory_space<vmem>>, %arg11: memref<8x8xf32, #tpu.memory_space<vmem>>, %arg12: memref<8x8xf32, #tpu.memory_space<vmem>>, %arg13: memref<1x8x32xbf16, #tpu.memory_space<vmem>>) attributes {dimension_semantics = [#tpu.dimension_semantics<parallel>], iteration_bounds = array<i64: 2>, scalar_prefetch = 0 : i64, scratch_operands = 0 : i64, tpu.core_type = #tpu.core_type<tc>, window_params = [{transform_indices = @transform_0, window_bounds = array<i64: 1, 8, 32>}, {pipeline_mode = #tpu.pipeline_mode<synchronous>, transform_indices = @transform_1, window_bounds = array<i64: 1, 32>}, {pipeline_mode = #tpu.pipeline_mode<synchronous>, transform_indices = @transform_2, window_bounds = array<i64: 32, 32>}, {pipeline_mode = #tpu.pipeline_mode<synchronous>, transform_indices = @transform_3, window_bounds = array<i64: 32, 16>}, {pipeline_mode = #tpu.pipeline_mode<synchronous>, transform_indices = @transform_4, window_bounds = array<i64: 32, 16>}, {pipeline_mode = #tpu.pipeline_mode<synchronous>, transform_indices = @transform_5, window_bounds = array<i64: 32, 32>}, {pipeline_mode = #tpu.pipeline_mode<synchronous>, transform_indices = @transform_6, window_bounds = array<i64: 1, 32>}, {pipeline_mode = #tpu.pipeline_mode<synchronous>, transform_indices = @transform_7, window_bounds = array<i64: 32, 64>}, {pipeline_mode = #tpu.pipeline_mode<synchronous>, transform_indices = @transform_8, window_bounds = array<i64: 32, 64>}, {pipeline_mode = #tpu.pipeline_mode<synchronous>, transform_indices = @transform_9, window_bounds = array<i64: 64, 32>}, {pipeline_mode = #tpu.pipeline_mode<synchronous>, transform_indices = @transform_10, window_bounds = array<i64: 8, 8>}, {pipeline_mode = #tpu.pipeline_mode<synchronous>, transform_indices = @transform_11, window_bounds = array<i64: 8, 8>}, {transform_indices = @transform_12, window_bounds = array<i64: 1, 8, 32>}]} {
    %c0 = arith.constant 0 : index
    %c0_0 = arith.constant 0 : index
    %c0_1 = arith.constant 0 : index
    %0 = vector.load %arg1[%c0, %c0_0, %c0_1] : memref<1x8x32xbf16, #tpu.memory_space<vmem>>, vector<1x8x32xbf16>
    %1 = vector.shape_cast %0 : vector<1x8x32xbf16> to vector<8x32xbf16>
    %2 = arith.extf %1 : vector<8x32xbf16> to vector<8x32xf32>
    %c0_2 = arith.constant 0 : index
    %c0_3 = arith.constant 0 : index
    %3 = vector.load %arg2[%c0_2, %c0_3] : memref<1x32xf32, #tpu.memory_space<vmem>>, vector<1x32xf32>
    %4 = arith.mulf %2, %2 : vector<8x32xf32>
    %cst = arith.constant dense<0.000000e+00> : vector<8xf32>
    %5 = vector.multi_reduction <add>, %4, %cst [1] : vector<8x32xf32> to vector<8xf32>
    %6 = vector.shape_cast %5 : vector<8xf32> to vector<8x1xf32>
    %cst_4 = arith.constant 3.200000e+01 : f32
    %7 = vector.broadcast %cst_4 : f32 to vector<8x1xf32>
    %8 = arith.divf %6, %7 : vector<8x1xf32>
    %cst_5 = arith.constant 9.99999974E-6 : f32
    %9 = vector.broadcast %cst_5 : f32 to vector<8x1xf32>
    %10 = arith.addf %8, %9 : vector<8x1xf32>
    %11 = math.rsqrt %10 : vector<8x1xf32>
    %12 = vector.broadcast %11 : vector<8x1xf32> to vector<8x32xf32>
    %13 = arith.mulf %2, %12 : vector<8x32xf32>
    %14 = vector.broadcast %3 : vector<1x32xf32> to vector<8x32xf32>
    %15 = arith.mulf %13, %14 : vector<8x32xf32>
    %16 = arith.truncf %15 : vector<8x32xf32> to vector<8x32xbf16>
    %c0_6 = arith.constant 0 : index
    %c0_7 = arith.constant 0 : index
    %17 = vector.load %arg3[%c0_6, %c0_7] : memref<32x32xbf16, #tpu.memory_space<vmem>>, vector<32x32xbf16>
    %cst_8 = arith.constant dense<0.000000e+00> : vector<8x32xf32>
    %18 = tpu.matmul %16, %17, %cst_8 {dimension_numbers = #tpu.dot_dimension_numbers<[1], [0], [0], [1], [0, 0, 1, 1], [], []>} : vector<8x32xbf16>, vector<32x32xbf16>, vector<8x32xf32> -> vector<8x32xf32>
    %c0_9 = arith.constant 0 : index
    %c0_10 = arith.constant 0 : index
    %19 = vector.load %arg4[%c0_9, %c0_10] : memref<32x16xbf16, #tpu.memory_space<vmem>>, vector<32x16xbf16>
    %cst_11 = arith.constant dense<0.000000e+00> : vector<8x16xf32>
    %20 = tpu.matmul %16, %19, %cst_11 {dimension_numbers = #tpu.dot_dimension_numbers<[1], [0], [0], [1], [0, 0, 1, 1], [], []>} : vector<8x32xbf16>, vector<32x16xbf16>, vector<8x16xf32> -> vector<8x16xf32>
    %c0_12 = arith.constant 0 : index
    %c0_13 = arith.constant 0 : index
    %21 = vector.load %arg5[%c0_12, %c0_13] : memref<32x16xbf16, #tpu.memory_space<vmem>>, vector<32x16xbf16>
    %cst_14 = arith.constant dense<0.000000e+00> : vector<8x16xf32>
    %22 = tpu.matmul %16, %21, %cst_14 {dimension_numbers = #tpu.dot_dimension_numbers<[1], [0], [0], [1], [0, 0, 1, 1], [], []>} : vector<8x32xbf16>, vector<32x16xbf16>, vector<8x16xf32> -> vector<8x16xf32>
    %c0_15 = arith.constant 0 : index
    %c0_16 = arith.constant 0 : index
    %23 = vector.load %arg11[%c0_15, %c0_16] : memref<8x8xf32, #tpu.memory_space<vmem>>, vector<8x8xf32>
    %24 = vector.shape_cast %23 : vector<8x8xf32> to vector<8x1x8xf32>
    %c0_17 = arith.constant 0 : index
    %c0_18 = arith.constant 0 : index
    %25 = vector.load %arg12[%c0_17, %c0_18] : memref<8x8xf32, #tpu.memory_space<vmem>>, vector<8x8xf32>
    %26 = vector.shape_cast %25 : vector<8x8xf32> to vector<8x1x8xf32>
    %27 = vector.shape_cast %18 : vector<8x32xf32> to vector<8x4x8xf32>
    %28 = vector.extract_strided_slice %27 {offsets = [0, 0, 0], sizes = [8, 4, 4], strides = [1, 1, 1]} : vector<8x4x8xf32> to vector<8x4x4xf32>
    %29 = vector.extract_strided_slice %27 {offsets = [0, 0, 4], sizes = [8, 4, 4], strides = [1, 1, 1]} : vector<8x4x8xf32> to vector<8x4x4xf32>
    %cst_19 = arith.constant 0.000000e+00 : f32
    %30 = vector.broadcast %cst_19 : f32 to vector<8x4x4xf32>
    %31 = arith.subf %30, %29 : vector<8x4x4xf32>
    %32 = tpu.concatenate %31, %28 in 2 : vector<8x4x4xf32>, vector<8x4x4xf32> -> vector<8x4x8xf32>
    %33 = vector.broadcast %24 : vector<8x1x8xf32> to vector<8x4x8xf32>
    %34 = arith.mulf %27, %33 : vector<8x4x8xf32>
    %35 = vector.broadcast %26 : vector<8x1x8xf32> to vector<8x4x8xf32>
    %36 = arith.mulf %32, %35 : vector<8x4x8xf32>
    %37 = arith.addf %34, %36 : vector<8x4x8xf32>
    %38 = vector.shape_cast %20 : vector<8x16xf32> to vector<8x2x8xf32>
    %39 = vector.extract_strided_slice %38 {offsets = [0, 0, 0], sizes = [8, 2, 4], strides = [1, 1, 1]} : vector<8x2x8xf32> to vector<8x2x4xf32>
    %40 = vector.extract_strided_slice %38 {offsets = [0, 0, 4], sizes = [8, 2, 4], strides = [1, 1, 1]} : vector<8x2x8xf32> to vector<8x2x4xf32>
    %cst_20 = arith.constant 0.000000e+00 : f32
    %41 = vector.broadcast %cst_20 : f32 to vector<8x2x4xf32>
    %42 = arith.subf %41, %40 : vector<8x2x4xf32>
    %43 = tpu.concatenate %42, %39 in 2 : vector<8x2x4xf32>, vector<8x2x4xf32> -> vector<8x2x8xf32>
    %44 = vector.broadcast %24 : vector<8x1x8xf32> to vector<8x2x8xf32>
    %45 = arith.mulf %38, %44 : vector<8x2x8xf32>
    %46 = vector.broadcast %26 : vector<8x1x8xf32> to vector<8x2x8xf32>
    %47 = arith.mulf %43, %46 : vector<8x2x8xf32>
    %48 = arith.addf %45, %47 : vector<8x2x8xf32>
    %49 = vector.shape_cast %22 : vector<8x16xf32> to vector<8x2x8xf32>
    %50 = tpu.transpose %37, [1, 0, 2] : vector<8x4x8xf32> -> vector<4x8x8xf32>
    %51 = vector.shape_cast %50 : vector<4x8x8xf32> to vector<2x16x8xf32>
    %52 = tpu.transpose %48, [1, 0, 2] : vector<8x2x8xf32> -> vector<2x8x8xf32>
    %53 = tpu.transpose %49, [1, 0, 2] : vector<8x2x8xf32> -> vector<2x8x8xf32>
    %cst_21 = arith.constant 0.353553385 : f32
    %54 = vector.broadcast %cst_21 : f32 to vector<2x16x8xf32>
    %55 = arith.mulf %51, %54 : vector<2x16x8xf32>
    %56 = arith.truncf %55 : vector<2x16x8xf32> to vector<2x16x8xbf16>
    %57 = arith.truncf %52 : vector<2x8x8xf32> to vector<2x8x8xbf16>
    "tpu.trace_start"() <{level = 10 : i32, message = "gmd,gnd->gmn"}> : () -> ()
    %cst_22 = arith.constant dense<0.000000e+00> : vector<2x16x8xf32>
    %58 = tpu.matmul %56, %57, %cst_22 {dimension_numbers = #tpu.dot_dimension_numbers<[2], [2], [1], [1], [0, 0, 0, 1, 1, 1], [0], [0]>} : vector<2x16x8xbf16>, vector<2x8x8xbf16>, vector<2x16x8xf32> -> vector<2x16x8xf32>
    "tpu.trace_stop"() : () -> ()
    %59 = tpu.iota {dimensions = array<i32: 1>} : vector<2x8x8xi32>
    %60 = vector.shape_cast %59 : vector<2x8x8xi32> to vector<1x16x8xi32>
    %61 = tpu.iota {dimensions = array<i32: 2>} : vector<2x8x8xi32>
    %62 = vector.shape_cast %61 : vector<2x8x8xi32> to vector<1x16x8xi32>
    %63 = arith.cmpi sle, %62, %60 : vector<1x16x8xi32>
    %cst_23 = arith.constant -1.000000e+30 : f32
    %64 = vector.shape_cast %63 : vector<1x16x8xi1> to vector<1x16x8xi1>
    %65 = vector.broadcast %64 : vector<1x16x8xi1> to vector<2x16x8xi1>
    %66 = vector.broadcast %cst_23 : f32 to vector<2x16x8xf32>
    %67 = arith.select %65, %58, %66 : vector<2x16x8xi1>, vector<2x16x8xf32>
    %cst_24 = arith.constant dense<0xFF800000> : vector<2x16xf32>
    %68 = vector.multi_reduction <maximumf>, %67, %cst_24 [2] : vector<2x16x8xf32> to vector<2x16xf32>
    %69 = vector.shape_cast %68 : vector<2x16xf32> to vector<2x16x1xf32>
    %70 = vector.broadcast %69 : vector<2x16x1xf32> to vector<2x16x8xf32>
    %71 = arith.subf %67, %70 : vector<2x16x8xf32>
    %72 = math.exp %71 : vector<2x16x8xf32>
    %cst_25 = arith.constant dense<0.000000e+00> : vector<2x16xf32>
    %73 = vector.multi_reduction <add>, %72, %cst_25 [2] : vector<2x16x8xf32> to vector<2x16xf32>
    %74 = vector.shape_cast %73 : vector<2x16xf32> to vector<2x16x1xf32>
    %75 = tpu.reciprocal %74 {approx = true} : vector<2x16x1xf32> -> vector<2x16x1xf32>
    %76 = vector.broadcast %75 : vector<2x16x1xf32> to vector<2x16x8xf32>
    %77 = arith.mulf %72, %76 : vector<2x16x8xf32>
    %78 = arith.truncf %77 : vector<2x16x8xf32> to vector<2x16x8xbf16>
    %79 = arith.truncf %53 : vector<2x8x8xf32> to vector<2x8x8xbf16>
    "tpu.trace_start"() <{level = 10 : i32, message = "gmn,gnd->gmd"}> : () -> ()
    %cst_26 = arith.constant dense<0.000000e+00> : vector<2x16x8xf32>
    %80 = tpu.matmul %78, %79, %cst_26 {dimension_numbers = #tpu.dot_dimension_numbers<[2], [1], [1], [2], [0, 0, 0, 1, 1, 2], [0], [0]>} : vector<2x16x8xbf16>, vector<2x8x8xbf16>, vector<2x16x8xf32> -> vector<2x16x8xf32>
    "tpu.trace_stop"() : () -> ()
    %81 = vector.shape_cast %80 : vector<2x16x8xf32> to vector<4x8x8xf32>
    %82 = tpu.transpose %81, [1, 0, 2] : vector<4x8x8xf32> -> vector<8x4x8xf32>
    %83 = vector.shape_cast %82 : vector<8x4x8xf32> to vector<8x32xf32>
    %84 = arith.truncf %83 : vector<8x32xf32> to vector<8x32xbf16>
    %c0_27 = arith.constant 0 : index
    %c0_28 = arith.constant 0 : index
    %85 = vector.load %arg6[%c0_27, %c0_28] : memref<32x32xbf16, #tpu.memory_space<vmem>>, vector<32x32xbf16>
    %cst_29 = arith.constant dense<0.000000e+00> : vector<8x32xf32>
    %86 = tpu.matmul %84, %85, %cst_29 {dimension_numbers = #tpu.dot_dimension_numbers<[1], [0], [0], [1], [0, 0, 1, 1], [], []>} : vector<8x32xbf16>, vector<32x32xbf16>, vector<8x32xf32> -> vector<8x32xf32>
    %87 = arith.addf %2, %86 : vector<8x32xf32>
    %c0_30 = arith.constant 0 : index
    %c0_31 = arith.constant 0 : index
    %88 = vector.load %arg7[%c0_30, %c0_31] : memref<1x32xf32, #tpu.memory_space<vmem>>, vector<1x32xf32>
    %89 = arith.mulf %87, %87 : vector<8x32xf32>
    %cst_32 = arith.constant dense<0.000000e+00> : vector<8xf32>
    %90 = vector.multi_reduction <add>, %89, %cst_32 [1] : vector<8x32xf32> to vector<8xf32>
    %91 = vector.shape_cast %90 : vector<8xf32> to vector<8x1xf32>
    %cst_33 = arith.constant 3.200000e+01 : f32
    %92 = vector.broadcast %cst_33 : f32 to vector<8x1xf32>
    %93 = arith.divf %91, %92 : vector<8x1xf32>
    %cst_34 = arith.constant 9.99999974E-6 : f32
    %94 = vector.broadcast %cst_34 : f32 to vector<8x1xf32>
    %95 = arith.addf %93, %94 : vector<8x1xf32>
    %96 = math.rsqrt %95 : vector<8x1xf32>
    %97 = vector.broadcast %96 : vector<8x1xf32> to vector<8x32xf32>
    %98 = arith.mulf %87, %97 : vector<8x32xf32>
    %99 = vector.broadcast %88 : vector<1x32xf32> to vector<8x32xf32>
    %100 = arith.mulf %98, %99 : vector<8x32xf32>
    %101 = arith.truncf %100 : vector<8x32xf32> to vector<8x32xbf16>
    %c0_35 = arith.constant 0 : index
    %c0_36 = arith.constant 0 : index
    %102 = vector.load %arg8[%c0_35, %c0_36] : memref<32x64xbf16, #tpu.memory_space<vmem>>, vector<32x64xbf16>
    %cst_37 = arith.constant dense<0.000000e+00> : vector<8x64xf32>
    %103 = tpu.matmul %101, %102, %cst_37 {dimension_numbers = #tpu.dot_dimension_numbers<[1], [0], [0], [1], [0, 0, 1, 1], [], []>} : vector<8x32xbf16>, vector<32x64xbf16>, vector<8x64xf32> -> vector<8x64xf32>
    %c0_38 = arith.constant 0 : index
    %c0_39 = arith.constant 0 : index
    %104 = vector.load %arg9[%c0_38, %c0_39] : memref<32x64xbf16, #tpu.memory_space<vmem>>, vector<32x64xbf16>
    %cst_40 = arith.constant dense<0.000000e+00> : vector<8x64xf32>
    %105 = tpu.matmul %101, %104, %cst_40 {dimension_numbers = #tpu.dot_dimension_numbers<[1], [0], [0], [1], [0, 0, 1, 1], [], []>} : vector<8x32xbf16>, vector<32x64xbf16>, vector<8x64xf32> -> vector<8x64xf32>
    %106 = arith.negf %103 : vector<8x64xf32>
    %107 = math.exp %106 : vector<8x64xf32>
    %cst_41 = arith.constant 1.000000e+00 : f32
    %108 = vector.broadcast %cst_41 : f32 to vector<8x64xf32>
    %109 = arith.addf %108, %107 : vector<8x64xf32>
    %110 = arith.divf %108, %109 : vector<8x64xf32>
    %111 = arith.mulf %103, %110 : vector<8x64xf32>
    %112 = arith.mulf %111, %105 : vector<8x64xf32>
    %113 = arith.truncf %112 : vector<8x64xf32> to vector<8x64xbf16>
    %c0_42 = arith.constant 0 : index
    %c0_43 = arith.constant 0 : index
    %114 = vector.load %arg10[%c0_42, %c0_43] : memref<64x32xbf16, #tpu.memory_space<vmem>>, vector<64x32xbf16>
    %cst_44 = arith.constant dense<0.000000e+00> : vector<8x32xf32>
    %115 = tpu.matmul %113, %114, %cst_44 {dimension_numbers = #tpu.dot_dimension_numbers<[1], [0], [0], [1], [0, 0, 1, 1], [], []>} : vector<8x64xbf16>, vector<64x32xbf16>, vector<8x32xf32> -> vector<8x32xf32>
    %116 = arith.addf %87, %115 : vector<8x32xf32>
    %117 = arith.truncf %116 : vector<8x32xf32> to vector<8x32xbf16>
    %c0_45 = arith.constant 0 : index
    %c0_46 = arith.constant 0 : index
    %c0_47 = arith.constant 0 : index
    %118 = vector.load %arg13[%c0_45, %c0_46, %c0_47] : memref<1x8x32xbf16, #tpu.memory_space<vmem>>, vector<1x8x32xbf16>
    %119 = vector.shape_cast %118 : vector<1x8x32xbf16> to vector<8x32xbf16>
    %120 = vector.shape_cast %117 : vector<8x32xbf16> to vector<1x8x32xbf16>
    tpu.vector_store %arg13[%c0_45, %c0_46, %c0_47], %120 {strides = array<i32>} : memref<1x8x32xbf16, #tpu.memory_space<vmem>>, vector<1x8x32xbf16>,
    return
  }
  func.func @transform_0(%arg0: i32) -> (i32, i32, i32) {
    %c0_i32 = arith.constant 0 : i32
    %c0_i32_0 = arith.constant 0 : i32
    %c0_i32_1 = arith.constant 0 : i32
    return %arg0, %c0_i32, %c0_i32_0 : i32, i32, i32
  }
  func.func @transform_1(%arg0: i32) -> (i32, i32) {
    %c0_i32 = arith.constant 0 : i32
    %c0_i32_0 = arith.constant 0 : i32
    %c0_i32_1 = arith.constant 0 : i32
    return %c0_i32, %c0_i32_0 : i32, i32
  }
  func.func @transform_2(%arg0: i32) -> (i32, i32) {
    %c0_i32 = arith.constant 0 : i32
    %c0_i32_0 = arith.constant 0 : i32
    %c0_i32_1 = arith.constant 0 : i32
    return %c0_i32, %c0_i32_0 : i32, i32
  }
  func.func @transform_3(%arg0: i32) -> (i32, i32) {
    %c0_i32 = arith.constant 0 : i32
    %c0_i32_0 = arith.constant 0 : i32
    %c0_i32_1 = arith.constant 0 : i32
    return %c0_i32, %c0_i32_0 : i32, i32
  }
  func.func @transform_4(%arg0: i32) -> (i32, i32) {
    %c0_i32 = arith.constant 0 : i32
    %c0_i32_0 = arith.constant 0 : i32
    %c0_i32_1 = arith.constant 0 : i32
    return %c0_i32, %c0_i32_0 : i32, i32
  }
  func.func @transform_5(%arg0: i32) -> (i32, i32) {
    %c0_i32 = arith.constant 0 : i32
    %c0_i32_0 = arith.constant 0 : i32
    %c0_i32_1 = arith.constant 0 : i32
    return %c0_i32, %c0_i32_0 : i32, i32
  }
  func.func @transform_6(%arg0: i32) -> (i32, i32) {
    %c0_i32 = arith.constant 0 : i32
    %c0_i32_0 = arith.constant 0 : i32
    %c0_i32_1 = arith.constant 0 : i32
    return %c0_i32, %c0_i32_0 : i32, i32
  }
  func.func @transform_7(%arg0: i32) -> (i32, i32) {
    %c0_i32 = arith.constant 0 : i32
    %c0_i32_0 = arith.constant 0 : i32
    %c0_i32_1 = arith.constant 0 : i32
    return %c0_i32, %c0_i32_0 : i32, i32
  }
  func.func @transform_8(%arg0: i32) -> (i32, i32) {
    %c0_i32 = arith.constant 0 : i32
    %c0_i32_0 = arith.constant 0 : i32
    %c0_i32_1 = arith.constant 0 : i32
    return %c0_i32, %c0_i32_0 : i32, i32
  }
  func.func @transform_9(%arg0: i32) -> (i32, i32) {
    %c0_i32 = arith.constant 0 : i32
    %c0_i32_0 = arith.constant 0 : i32
    %c0_i32_1 = arith.constant 0 : i32
    return %c0_i32, %c0_i32_0 : i32, i32
  }
  func.func @transform_10(%arg0: i32) -> (i32, i32) {
    %c0_i32 = arith.constant 0 : i32
    %c0_i32_0 = arith.constant 0 : i32
    %c0_i32_1 = arith.constant 0 : i32
    return %c0_i32, %c0_i32_0 : i32, i32
  }
  func.func @transform_11(%arg0: i32) -> (i32, i32) {
    %c0_i32 = arith.constant 0 : i32
    %c0_i32_0 = arith.constant 0 : i32
    %c0_i32_1 = arith.constant 0 : i32
    return %c0_i32, %c0_i32_0 : i32, i32
  }
  func.func @transform_12(%arg0: i32) -> (i32, i32, i32) {
    %c0_i32 = arith.constant 0 : i32
    %c0_i32_0 = arith.constant 0 : i32
    %c0_i32_1 = arith.constant 0 : i32
    return %arg0, %c0_i32, %c0_i32_0 : i32, i32, i32
  }
}

</mosaic_0001>

<llo_original>
// kernel: mistral_forward.5
$region0: #{mistral_forward.5}
  #allocation0 [shape = 'u32[]', space=smem, size = 0x4, offset = 0x4, fixed_abs, tag = 'smem constant byte address 0x4 - core index']
  #allocation1 [shape = 'u32[72,128]{1,0:T(1,128)}', space=vmem, size = 0x9000, scoped, tag = 'internal scratch']
  %s0 = inlined_call_operand.vmem [shape: bf16[2,8,32], index: 0, kind: input, shape index: {}]
  %s1 = inlined_call_operand.vmem [shape: f32[1,32], index: 1, kind: input, shape index: {}]
  %s2 = inlined_call_operand.vmem [shape: bf16[32,64], index: 2, kind: input, shape index: {}]
  %s3 = inlined_call_operand.hbm [shape: f32[2,8,64], index: 3, kind: output, shape index: {}]
  %s4 = sld [smem:[#allocation0]]
  $region45: #{mistral_forward.5} parent=0
    _
  %s6 = ssub.s32 1, %s4
  %s7 = scalar_select 0, %s6, %s4
  $region1: #{mistral_forward.5} parent=0
    #allocation2 [shape = 'u8[8192]{0}', space=vmem, size = 0x2000, scoped, tag = 'output window, operand 0']
    #allocation3 [shape = 's32[2]{0}', space=sflag, size = 0x8, scoped, tag = 'scoped memory for mistral_forward.5']
    %8 = vsyncpa [#allocation3], 0
    %s9 = scalar_lea.sflag [#allocation3], 1
    %10 = vsyncpa %s9, 0
    loop: start=0, step=1, limit=4
    $region2: #{mistral_forward.5} parent=1 // loop_pre_header
      _
    $region3: #{mistral_forward.5} parent=1 // loop_header
      %s12 = sphi 0, %s16
      %p13 = scmp.ge.s32.totalorder %s12, 4
      %s22 = sphi 0, %s24
      %s25 = sphi 0, %s22
      %s26 = sphi 0, %s25
      %s42 = sphi 0, %s26
      %s46 = sphi 0, %s46
      %s48 = sphi 0, %s46
      %s49 = sphi 0, %s48
      %s63 = sphi 0, %s49
      %s67 = sphi 0, %s67
      %s69 = sphi 0, %s67
      %s70 = sphi 0, %s69
      %s84 = sphi 0, %s70
      %s90 = sphi 0, %s92
      %s93 = sphi 0, %s90
      %s94 = sphi 0, %s93
      %s110 = sphi 0, %s94
    $region4: #{mistral_forward.5} parent=1 // loop_header_branch
      %15 = sbr.rel (%p13) target = $region8
    $region5: #{mistral_forward.5} parent=1 // loop_body
      %s17 = ssub.s32 %s12, 1
      %s18 = ssub.s32 %s12, 2
      %s19 = sadd.s32 %s12, 1
      %s20 = ssub.s32 %s12, %s19
      %p21 = scmp.eq.s32.totalorder %s20, 0
      %s23 = sadd.s32 %s22, 1
      %s24 = scalar_select %p21, %s22, %s23
      %p27 = pneg %p21
      %p28 = scmp.eq.s32.totalorder %s12, 1
      %p29 = por %p27, %p28
      %p30 = scmp.ne.s32.totalorder %s22, %s25
      %p31 = scmp.eq.s32.totalorder %s12, 0
      %p32 = por %p30, %p31
      %p33 = scmp.ne.s32.totalorder %s22, %s25
      %p34 = scmp.eq.s32.totalorder %s17, 1
      %p35 = por %p33, %p34
      %p36 = scmp.ne.s32.totalorder %s25, %s26
      %p37 = scmp.eq.s32.totalorder %s17, 0
      %p38 = por %p36, %p37
      %p39 = scmp.ne.s32.totalorder %s25, %s26
      %p40 = scmp.eq.s32.totalorder %s18, 1
      %p41 = por %p39, %p40
      %p43 = scmp.ne.s32.totalorder %s26, %s42
      %p44 = scmp.eq.s32.totalorder %s18, 0
      %p45 = por %p43, %p44
      %s47 = sadd.s32 %s46, 1
      %p50 = scmp.eq.s32.totalorder %s12, 1
      %p51 = scmp.ne.s32.totalorder %s46, %s48
      %p52 = scmp.eq.s32.totalorder %s12, 0
      %p53 = por %p51, %p52
      %p54 = scmp.ne.s32.totalorder %s46, %s48
      %p55 = scmp.eq.s32.totalorder %s17, 1
      %p56 = por %p54, %p55
      %p57 = scmp.ne.s32.totalorder %s48, %s49
      %p58 = scmp.eq.s32.totalorder %s17, 0
      %p59 = por %p57, %p58
      %p60 = scmp.ne.s32.totalorder %s48, %s49
      %p61 = scmp.eq.s32.totalorder %s18, 1
      %p62 = por %p60, %p61
      %p64 = scmp.ne.s32.totalorder %s49, %s63
      %p65 = scmp.eq.s32.totalorder %s18, 0
      %p66 = por %p64, %p65
      %s68 = sadd.s32 %s67, 1
      %p71 = scmp.eq.s32.totalorder %s12, 1
      %p72 = scmp.ne.s32.totalorder %s67, %s69
      %p73 = scmp.eq.s32.totalorder %s12, 0
      %p74 = por %p72, %p73
      %p75 = scmp.ne.s32.totalorder %s67, %s69
      %p76 = scmp.eq.s32.totalorder %s17, 1
      %p77 = por %p75, %p76
      %p78 = scmp.ne.s32.totalorder %s69, %s70
      %p79 = scmp.eq.s32.totalorder %s17, 0
      %p80 = por %p78, %p79
      %p81 = scmp.ne.s32.totalorder %s69, %s70
      %p82 = scmp.eq.s32.totalorder %s18, 1
      %p83 = por %p81, %p82
      %p85 = scmp.ne.s32.totalorder %s70, %s84
      %p86 = scmp.eq.s32.totalorder %s18, 0
      %p87 = por %p85, %p86
      %s88 = ssub.s32 %s12, %s19
      %p89 = scmp.eq.s32.totalorder %s88, 0
      %s91 = sadd.s32 %s90, 1
      %s92 = scalar_select %p89, %s90, %s91
      %p95 = pneg %p89
      %p96 = scmp.eq.s32.totalorder %s12, 1
      %p97 = por %p95, %p96
      %p98 = scmp.ne.s32.totalorder %s90, %s93
      %p99 = scmp.eq.s32.totalorder %s12, 0
      %p100 = por %p98, %p99
      %p101 = scmp.ne.s32.totalorder %s90, %s93
      %p102 = scmp.eq.s32.totalorder %s17, 1
      %p103 = por %p101, %p102
      %p104 = scmp.ne.s32.totalorder %s93, %s94
      %p105 = scmp.eq.s32.totalorder %s17, 0
      %p106 = por %p104, %p105
      %p107 = scmp.ne.s32.totalorder %s93, %s94
      %p108 = scmp.eq.s32.totalorder %s18, 1
      %p109 = por %p107, %p108
      %p111 = scmp.ne.s32.totalorder %s94, %s110
      %p112 = scmp.eq.s32.totalorder %s18, 0
      %p113 = por %p111, %p112
      %p114 = scmp.le.s32.totalorder 1, %s12
      %p115 = scmp.lt.s32.totalorder %s12, 3
      %p116 = pnand %p114, %p115
      %p117 = pneg %p116
      // Predicated region
      $region9: #{mistral_forward.5} parent=5 // pred_check
        _
      $region10: #{mistral_forward.5} parent=5 // pred_check_branch
        %119 = sbr.rel (%p116) target = $region12
      $region11: #{mistral_forward.5} parent=5 // pred_region
        %s120 = ssub.s32 %s12, 1
        // Predicated region
        $region13: #{mistral_forward.5} parent=11 // pred_check
          %p121 = pneg %p59
        $region14: #{mistral_forward.5} parent=11 // pred_check_branch
          %123 = sbr.rel (%p121) target = $region16
        $region15: #{mistral_forward.5} parent=11 // pred_region
          _
        $region16: #{mistral_forward.5} parent=11 // pred_fallthru
          _
        // Predicated region
        $region17: #{mistral_forward.5} parent=11 // pred_check
          %p124 = pneg %p80
        $region18: #{mistral_forward.5} parent=11 // pred_check_branch
          %126 = sbr.rel (%p124) target = $region20
        $region19: #{mistral_forward.5} parent=11 // pred_region
          _
        $region20: #{mistral_forward.5} parent=11 // pred_fallthru
          _
      $region12: #{mistral_forward.5} parent=5 // pred_fallthru
        _
      %p127 = scmp.lt.s32.totalorder %s12, 2
      // Predicated region
      $region21: #{mistral_forward.5} parent=5 // pred_check
        %p128 = pneg %p127
      $region22: #{mistral_forward.5} parent=5 // pred_check_branch
        %130 = sbr.rel (%p128) target = $region24
      $region23: #{mistral_forward.5} parent=5 // pred_region
        // Predicated region
        $region25: #{mistral_forward.5} parent=23 // pred_check
          %p131 = pneg %p32
        $region26: #{mistral_forward.5} parent=23 // pred_check_branch
          %133 = sbr.rel (%p131) target = $region28
        $region27: #{mistral_forward.5} parent=23 // pred_region
          %p134 = scmp.lt.s32.totalorder %s12, 1
          %s135 = scalar_select %p134, %s12, 1
          %s136 = smul.addr %s135, 4
          %s137 = scalar_lea.vmem %s0, %s136
        $region28: #{mistral_forward.5} parent=23 // pred_fallthru
          _
      $region24: #{mistral_forward.5} parent=5 // pred_fallthru
        _
      %p138 = scmp.le.s32.totalorder 1, %s12
      %p139 = scmp.lt.s32.totalorder %s12, 3
      %p140 = pnand %p138, %p139
      %p141 = pneg %p140
      // Predicated region
      $region29: #{mistral_forward.5} parent=5 // pred_check
        _
      $region30: #{mistral_forward.5} parent=5 // pred_check_branch
        %143 = sbr.rel (%p140) target = $region32
      $region31: #{mistral_forward.5} parent=5 // pred_region
        %s144 = ssub.s32 %s12, 1
        %p145 = scmp.lt.s32.totalorder %s17, 1
        %s146 = scalar_select %p145, %s17, 1
        %s147 = smul.addr %s146, 4
        %s148 = scalar_lea.vmem %s0, %s147
        %p149 = pneg %p38
        %p150 = pneg %p35
        %p151 = pneg %p59
        %p152 = pneg %p56
        %p153 = pneg %p80
        %p154 = pneg %p77
        %p155 = pneg %p106
        %p156 = pneg %p103
        %s157 = sand.u32 %s93, 1
        %s158 = scalar_lea.sflag [#allocation3], %s157
        %s159 = sand.u32 %s93, 1
        %s160 = smul.addr %s159, 8
        %s161 = scalar_lea.vmem [#allocation2], %s160
        %p162 = scmp.lt.s32.totalorder %s17, 1
        %s163 = scalar_select %p162, %s17, 1
        %s164 = smul.addr %s163, 4
        %s165 = scalar_lea.vmem %s0, %s164
        %v167 = vld [vmem:[%s165] sm:$0xf]
        %v168 = vunpack.c.l.bf16 %v167
        %v169 = vld [vmem:[%s1] sm:$0x1]
        %v170 = vmul.f32 %v168, %v168
        %vm171 = vcmask 261120
        %v172 = vsel %vm171, %v170, 0.0
        %173 = vadd.xlane.f32.xlu0 %v172
        %v174 = vpop.xlane.xlu0 %173
        %v175 = vrcp.pop 32.0
        %v176 = vmul.f32 32.0, %v175
        %v177 = vsub.f32 1.0, %v176
        %v178 = vmul.f32 %v175, %v177
        %v179 = vadd.f32 %v175, %v178
        %vm180 = vweird.f32 %v175
        %v181 = vsel %vm180, %v175, %v179
        %v182 = vmul.f32 %v174, %v181
        %v183 = vadd.f32 %v182, 1e-05
        %v184 = vrsqrt.pop %v183
        %v185 = vmul.f32 %v184, %v183
        %v186 = vmul.f32 %v185, %v184
        %v187 = vmul.f32 0.5, %v186
        %v188 = vsub.f32 1.5, %v187
        %v189 = vmul.f32 %v184, %v188
        %vm190 = vweird.f32 %v183
        %vm191 = vweird.f32 %v184
        %vm192 = vmor %vm190, %vm191
        %v193 = vsel %vm192, %v184, %v189
        %v194 = vmul.f32 %v168, %v193
        %v196 = vperm.slane %v169, 0
        %v198 = vmul.f32 %v194, %v196
        %v199 = vpack.c.bf16 %v198, %v198
        %v200 = vld [vmem:[%s2] sm:$0xf]
        %v201 = vld [vmem:[%s2 + $0x4] sm:$0xf]
        %v202 = vld [vmem:[%s2 + $0x8] sm:$0xf]
        %v203 = vld [vmem:[%s2 + $0xc] sm:$0xf]
        %v208 = vunpack.c.l.b16 %v200
        %v209 = vunpack.c.l.b16 %v201
        %v210 = vunpack.c.l.b16 %v202
        %v211 = vunpack.c.l.b16 %v203
        %v212 = vpack.c.b16 %v209, %v208
        %v213 = vpack.c.b16 %v211, %v210
        %v217 = vsel %vm171, %v199, 0
        %219 = vmatpush.bf16.msra.mxu0 0
        %220 = vmatpush.bf16.msra.mxu0 0
        %221 = vmatpush.bf16.msra.mxu0 0
        %222 = vmatpush.bf16.msra.mxu0 0
        %223 = vmatpush.bf16.msra.mxu0 0
        %224 = vmatpush.bf16.msra.mxu0 0
        %225 = vmatpush.bf16.msra.mxu0 %v213
        %226 = vmatpush.bf16.msra.mxu0 %v212
        %227 = vmatmul.bf16.gmra.mxu0 %v217
        %v228 = vpop.f32.mrf.mxu0
        %v229 = vadd.f32 0.0, %v228
        %v230 = vpop.f32.mrf.mxu0
        %231 = vdwg.mxu0
        %vm232 = vcmask 523264
        %233 = vst.msk [vmem:[%s161] sm:$0xff] %vm232, %v229
        %s234 = sand.u32 %s93, 1
        %s235 = scalar_lea.sflag [#allocation3], %s234
        %s236 = sand.u32 %s93, 1
        %s237 = smul.addr %s236, 8
        %s238 = scalar_lea.vmem [#allocation2], %s237
        // Predicated region
        $region33: #{mistral_forward.5} parent=31 // pred_check
          %p239 = pneg %p103
        $region34: #{mistral_forward.5} parent=31 // pred_check_branch
          %241 = sbr.rel (%p239) target = $region36
        $region35: #{mistral_forward.5} parent=31 // pred_region
          %243 = vsyncadd %s235, 0
          %s244 = smul.addr %s17, 8
          %s245 = scalar_lea.hbm %s3, %s244
          %s247 = sshll.u32 %s238, 4
          %s248 = int_to_ptr.vmem [resolvable:$true] %s247
          %s249 = sshll.u32 %s245, 4
          %s250 = int_to_ptr.hbm [resolvable:$true] %s249
          %252 = dma.vmem_to_hbm [thread:$0]  %s248, 128, %s250, %s235
        $region36: #{mistral_forward.5} parent=31 // pred_fallthru
          _
      $region32: #{mistral_forward.5} parent=5 // pred_fallthru
        _
      %p253 = scmp.le.s32.totalorder 2, %s12
      // Predicated region
      $region37: #{mistral_forward.5} parent=5 // pred_check
        %p254 = pneg %p253
      $region38: #{mistral_forward.5} parent=5 // pred_check_branch
        %256 = sbr.rel (%p254) target = $region40
      $region39: #{mistral_forward.5} parent=5 // pred_region
        %s257 = ssub.s32 %s12, 2
        // Predicated region
        $region41: #{mistral_forward.5} parent=39 // pred_check
          %p258 = pneg %p109
        $region42: #{mistral_forward.5} parent=39 // pred_check_branch
          %260 = sbr.rel (%p258) target = $region44
        $region43: #{mistral_forward.5} parent=39 // pred_region
          %s261 = sand.u32 %s94, 1
          %s262 = scalar_lea.sflag [#allocation3], %s261
          %s263 = sand.u32 %s94, 1
          %s264 = smul.addr %s263, 8
          %s265 = scalar_lea.vmem [#allocation2], %s264
          %267 = dma.done %s262, 128
        $region44: #{mistral_forward.5} parent=39 // pred_fallthru
          _
      $region40: #{mistral_forward.5} parent=5 // pred_fallthru
        _
    $region6: #{mistral_forward.5} parent=1 // loop_footer
      %s16 = sadd.s32 1, %s12
    $region7: #{mistral_forward.5} parent=1 // loop_footer_branch
      %11 = sbr.rel target = $region3
    $region8: #{mistral_forward.5} parent=1 // loop_exit
      _
    %268 = vsyncpa [#allocation3], 1
    %s269 = scalar_lea.sflag [#allocation3], 1
    %270 = vsyncpa %s269, 1

// kernel: mistral_forward.3
$region0: #{mistral_forward.3}
  #allocation0 [shape = 'u32[]', space=smem, size = 0x4, offset = 0x4, fixed_abs, tag = 'smem constant byte address 0x4 - core index']
  #allocation1 [shape = 'u32[72,128]{1,0:T(1,128)}', space=vmem, size = 0x9000, scoped, tag = 'internal scratch']
  %s0 = inlined_call_operand.vmem [shape: bf16[2,8,32], index: 0, kind: input, shape index: {}, may-alias: {0,12}]
  %s1 = inlined_call_operand.vmem [shape: f32[1,32], index: 1, kind: input, shape index: {}]
  %s2 = inlined_call_operand.vmem [shape: bf16[32,32], index: 2, kind: input, shape index: {}]
  %s3 = inlined_call_operand.vmem [shape: bf16[32,16], index: 3, kind: input, shape index: {}]
  %s4 = inlined_call_operand.vmem [shape: bf16[32,16], index: 4, kind: input, shape index: {}]
  %s5 = inlined_call_operand.vmem [shape: bf16[32,32], index: 5, kind: input, shape index: {}]
  %s6 = inlined_call_operand.vmem [shape: f32[1,32], index: 6, kind: input, shape index: {}]
  %s7 = inlined_call_operand.vmem [shape: bf16[32,64], index: 7, kind: input, shape index: {}]
  %s8 = inlined_call_operand.vmem [shape: bf16[32,64], index: 8, kind: input, shape index: {}]
  %s9 = inlined_call_operand.vmem [shape: bf16[64,32], index: 9, kind: input, shape index: {}]
  %s10 = inlined_call_operand.vmem [shape: f32[8,8], index: 10, kind: input, shape index: {}]
  %s11 = inlined_call_operand.vmem [shape: f32[8,8], index: 11, kind: input, shape index: {}]
  %s12 = inlined_call_operand.vmem [shape: bf16[2,8,32], index: 12, kind: output, shape index: {}, may-alias: {0,12}]
  %s13 = sld [smem:[#allocation0]]
  $region81: #{mistral_forward.3} parent=0
    _
  %s15 = ssub.s32 1, %s13
  %s16 = scalar_select 0, %s15, %s13
  loop: start=0, step=1, limit=4
  $region2: #{mistral_forward.3} parent=0 // loop_pre_header
    _
  $region3: #{mistral_forward.3} parent=0 // loop_header
    %s18 = sphi 0, %s22
    %p19 = scmp.ge.s32.totalorder %s18, 4
    %s28 = sphi 0, %s30
    %s31 = sphi 0, %s28
    %s32 = sphi 0, %s31
    %s48 = sphi 0, %s32
    %s52 = sphi 0, %s52
    %s54 = sphi 0, %s52
    %s55 = sphi 0, %s54
    %s69 = sphi 0, %s55
    %s73 = sphi 0, %s73
    %s75 = sphi 0, %s73
    %s76 = sphi 0, %s75
    %s90 = sphi 0, %s76
    %s94 = sphi 0, %s94
    %s96 = sphi 0, %s94
    %s97 = sphi 0, %s96
    %s111 = sphi 0, %s97
    %s115 = sphi 0, %s115
    %s117 = sphi 0, %s115
    %s118 = sphi 0, %s117
    %s132 = sphi 0, %s118
    %s136 = sphi 0, %s136
    %s138 = sphi 0, %s136
    %s139 = sphi 0, %s138
    %s153 = sphi 0, %s139
    %s157 = sphi 0, %s157
    %s159 = sphi 0, %s157
    %s160 = sphi 0, %s159
    %s174 = sphi 0, %s160
    %s178 = sphi 0, %s178
    %s180 = sphi 0, %s178
    %s181 = sphi 0, %s180
    %s195 = sphi 0, %s181
    %s199 = sphi 0, %s199
    %s201 = sphi 0, %s199
    %s202 = sphi 0, %s201
    %s216 = sphi 0, %s202
    %s220 = sphi 0, %s220
    %s222 = sphi 0, %s220
    %s223 = sphi 0, %s222
    %s237 = sphi 0, %s223
    %s241 = sphi 0, %s241
    %s243 = sphi 0, %s241
    %s244 = sphi 0, %s243
    %s258 = sphi 0, %s244
    %s262 = sphi 0, %s262
    %s264 = sphi 0, %s262
    %s265 = sphi 0, %s264
    %s279 = sphi 0, %s265
    %s285 = sphi 0, %s287
    %s288 = sphi 0, %s285
    %s289 = sphi 0, %s288
    %s305 = sphi 0, %s289
  $region4: #{mistral_forward.3} parent=0 // loop_header_branch
    %21 = sbr.rel (%p19) target = $region8
  $region5: #{mistral_forward.3} parent=0 // loop_body
    %s23 = ssub.s32 %s18, 1
    %s24 = ssub.s32 %s18, 2
    %s25 = sadd.s32 %s18, 1
    %s26 = ssub.s32 %s18, %s25
    %p27 = scmp.eq.s32.totalorder %s26, 0
    %s29 = sadd.s32 %s28, 1
    %s30 = scalar_select %p27, %s28, %s29
    %p33 = pneg %p27
    %p34 = scmp.eq.s32.totalorder %s18, 1
    %p35 = por %p33, %p34
    %p36 = scmp.ne.s32.totalorder %s28, %s31
    %p37 = scmp.eq.s32.totalorder %s18, 0
    %p38 = por %p36, %p37
    %p39 = scmp.ne.s32.totalorder %s28, %s31
    %p40 = scmp.eq.s32.totalorder %s23, 1
    %p41 = por %p39, %p40
    %p42 = scmp.ne.s32.totalorder %s31, %s32
    %p43 = scmp.eq.s32.totalorder %s23, 0
    %p44 = por %p42, %p43
    %p45 = scmp.ne.s32.totalorder %s31, %s32
    %p46 = scmp.eq.s32.totalorder %s24, 1
    %p47 = por %p45, %p46
    %p49 = scmp.ne.s32.totalorder %s32, %s48
    %p50 = scmp.eq.s32.totalorder %s24, 0
    %p51 = por %p49, %p50
    %s53 = sadd.s32 %s52, 1
    %p56 = scmp.eq.s32.totalorder %s18, 1
    %p57 = scmp.ne.s32.totalorder %s52, %s54
    %p58 = scmp.eq.s32.totalorder %s18, 0
    %p59 = por %p57, %p58
    %p60 = scmp.ne.s32.totalorder %s52, %s54
    %p61 = scmp.eq.s32.totalorder %s23, 1
    %p62 = por %p60, %p61
    %p63 = scmp.ne.s32.totalorder %s54, %s55
    %p64 = scmp.eq.s32.totalorder %s23, 0
    %p65 = por %p63, %p64
    %p66 = scmp.ne.s32.totalorder %s54, %s55
    %p67 = scmp.eq.s32.totalorder %s24, 1
    %p68 = por %p66, %p67
    %p70 = scmp.ne.s32.totalorder %s55, %s69
    %p71 = scmp.eq.s32.totalorder %s24, 0
    %p72 = por %p70, %p71
    %s74 = sadd.s32 %s73, 1
    %p77 = scmp.eq.s32.totalorder %s18, 1
    %p78 = scmp.ne.s32.totalorder %s73, %s75
    %p79 = scmp.eq.s32.totalorder %s18, 0
    %p80 = por %p78, %p79
    %p81 = scmp.ne.s32.totalorder %s73, %s75
    %p82 = scmp.eq.s32.totalorder %s23, 1
    %p83 = por %p81, %p82
    %p84 = scmp.ne.s32.totalorder %s75, %s76
    %p85 = scmp.eq.s32.totalorder %s23, 0
    %p86 = por %p84, %p85
    %p87 = scmp.ne.s32.totalorder %s75, %s76
    %p88 = scmp.eq.s32.totalorder %s24, 1
    %p89 = por %p87, %p88
    %p91 = scmp.ne.s32.totalorder %s76, %s90
    %p92 = scmp.eq.s32.totalorder %s24, 0
    %p93 = por %p91, %p92
    %s95 = sadd.s32 %s94, 1
    %p98 = scmp.eq.s32.totalorder %s18, 1
    %p99 = scmp.ne.s32.totalorder %s94, %s96
    %p100 = scmp.eq.s32.totalorder %s18, 0
    %p101 = por %p99, %p100
    %p102 = scmp.ne.s32.totalorder %s94, %s96
    %p103 = scmp.eq.s32.totalorder %s23, 1
    %p104 = por %p102, %p103
    %p105 = scmp.ne.s32.totalorder %s96, %s97
    %p106 = scmp.eq.s32.totalorder %s23, 0
    %p107 = por %p105, %p106
    %p108 = scmp.ne.s32.totalorder %s96, %s97
    %p109 = scmp.eq.s32.totalorder %s24, 1
    %p110 = por %p108, %p109
    %p112 = scmp.ne.s32.totalorder %s97, %s111
    %p113 = scmp.eq.s32.totalorder %s24, 0
    %p114 = por %p112, %p113
    %s116 = sadd.s32 %s115, 1
    %p119 = scmp.eq.s32.totalorder %s18, 1
    %p120 = scmp.ne.s32.totalorder %s115, %s117
    %p121 = scmp.eq.s32.totalorder %s18, 0
    %p122 = por %p120, %p121
    %p123 = scmp.ne.s32.totalorder %s115, %s117
    %p124 = scmp.eq.s32.totalorder %s23, 1
    %p125 = por %p123, %p124
    %p126 = scmp.ne.s32.totalorder %s117, %s118
    %p127 = scmp.eq.s32.totalorder %s23, 0
    %p128 = por %p126, %p127
    %p129 = scmp.ne.s32.totalorder %s117, %s118
    %p130 = scmp.eq.s32.totalorder %s24, 1
    %p131 = por %p129, %p130
    %p133 = scmp.ne.s32.totalorder %s118, %s132
    %p134 = scmp.eq.s32.totalorder %s24, 0
    %p135 = por %p133, %p134
    %s137 = sadd.s32 %s136, 1
    %p140 = scmp.eq.s32.totalorder %s18, 1
    %p141 = scmp.ne.s32.totalorder %s136, %s138
    %p142 = scmp.eq.s32.totalorder %s18, 0
    %p143 = por %p141, %p142
    %p144 = scmp.ne.s32.totalorder %s136, %s138
    %p145 = scmp.eq.s32.totalorder %s23, 1
    %p146 = por %p144, %p145
    %p147 = scmp.ne.s32.totalorder %s138, %s139
    %p148 = scmp.eq.s32.totalorder %s23, 0
    %p149 = por %p147, %p148
    %p150 = scmp.ne.s32.totalorder %s138, %s139
    %p151 = scmp.eq.s32.totalorder %s24, 1
    %p152 = por %p150, %p151
    %p154 = scmp.ne.s32.totalorder %s139, %s153
    %p155 = scmp.eq.s32.totalorder %s24, 0
    %p156 = por %p154, %p155
    %s158 = sadd.s32 %s157, 1
    %p161 = scmp.eq.s32.totalorder %s18, 1
    %p162 = scmp.ne.s32.totalorder %s157, %s159
    %p163 = scmp.eq.s32.totalorder %s18, 0
    %p164 = por %p162, %p163
    %p165 = scmp.ne.s32.totalorder %s157, %s159
    %p166 = scmp.eq.s32.totalorder %s23, 1
    %p167 = por %p165, %p166
    %p168 = scmp.ne.s32.totalorder %s159, %s160
    %p169 = scmp.eq.s32.totalorder %s23, 0
    %p170 = por %p168, %p169
    %p171 = scmp.ne.s32.totalorder %s159, %s160
    %p172 = scmp.eq.s32.totalorder %s24, 1
    %p173 = por %p171, %p172
    %p175 = scmp.ne.s32.totalorder %s160, %s174
    %p176 = scmp.eq.s32.totalorder %s24, 0
    %p177 = por %p175, %p176
    %s179 = sadd.s32 %s178, 1
    %p182 = scmp.eq.s32.totalorder %s18, 1
    %p183 = scmp.ne.s32.totalorder %s178, %s180
    %p184 = scmp.eq.s32.totalorder %s18, 0
    %p185 = por %p183, %p184
    %p186 = scmp.ne.s32.totalorder %s178, %s180
    %p187 = scmp.eq.s32.totalorder %s23, 1
    %p188 = por %p186, %p187
    %p189 = scmp.ne.s32.totalorder %s180, %s181
    %p190 = scmp.eq.s32.totalorder %s23, 0
    %p191 = por %p189, %p190
    %p192 = scmp.ne.s32.totalorder %s180, %s181
    %p193 = scmp.eq.s32.totalorder %s24, 1
    %p194 = por %p192, %p193
    %p196 = scmp.ne.s32.totalorder %s181, %s195
    %p197 = scmp.eq.s32.totalorder %s24, 0
    %p198 = por %p196, %p197
    %s200 = sadd.s32 %s199, 1
    %p203 = scmp.eq.s32.totalorder %s18, 1
    %p204 = scmp.ne.s32.totalorder %s199, %s201
    %p205 = scmp.eq.s32.totalorder %s18, 0
    %p206 = por %p204, %p205
    %p207 = scmp.ne.s32.totalorder %s199, %s201
    %p208 = scmp.eq.s32.totalorder %s23, 1
    %p209 = por %p207, %p208
    %p210 = scmp.ne.s32.totalorder %s201, %s202
    %p211 = scmp.eq.s32.totalorder %s23, 0
    %p212 = por %p210, %p211
    %p213 = scmp.ne.s32.totalorder %s201, %s202
    %p214 = scmp.eq.s32.totalorder %s24, 1
    %p215 = por %p213, %p214
    %p217 = scmp.ne.s32.totalorder %s202, %s216
    %p218 = scmp.eq.s32.totalorder %s24, 0
    %p219 = por %p217, %p218
    %s221 = sadd.s32 %s220, 1
    %p224 = scmp.eq.s32.totalorder %s18, 1
    %p225 = scmp.ne.s32.totalorder %s220, %s222
    %p226 = scmp.eq.s32.totalorder %s18, 0
    %p227 = por %p225, %p226
    %p228 = scmp.ne.s32.totalorder %s220, %s222
    %p229 = scmp.eq.s32.totalorder %s23, 1
    %p230 = por %p228, %p229
    %p231 = scmp.ne.s32.totalorder %s222, %s223
    %p232 = scmp.eq.s32.totalorder %s23, 0
    %p233 = por %p231, %p232
    %p234 = scmp.ne.s32.totalorder %s222, %s223
    %p235 = scmp.eq.s32.totalorder %s24, 1
    %p236 = por %p234, %p235
    %p238 = scmp.ne.s32.totalorder %s223, %s237
    %p239 = scmp.eq.s32.totalorder %s24, 0
    %p240 = por %p238, %p239
    %s242 = sadd.s32 %s241, 1
    %p245 = scmp.eq.s32.totalorder %s18, 1
    %p246 = scmp.ne.s32.totalorder %s241, %s243
    %p247 = scmp.eq.s32.totalorder %s18, 0
    %p248 = por %p246, %p247
    %p249 = scmp.ne.s32.totalorder %s241, %s243
    %p250 = scmp.eq.s32.totalorder %s23, 1
    %p251 = por %p249, %p250
    %p252 = scmp.ne.s32.totalorder %s243, %s244
    %p253 = scmp.eq.s32.totalorder %s23, 0
    %p254 = por %p252, %p253
    %p255 = scmp.ne.s32.totalorder %s243, %s244
    %p256 = scmp.eq.s32.totalorder %s24, 1
    %p257 = por %p255, %p256
    %p259 = scmp.ne.s32.totalorder %s244, %s258
    %p260 = scmp.eq.s32.totalorder %s24, 0
    %p261 = por %p259, %p260
    %s263 = sadd.s32 %s262, 1
    %p266 = scmp.eq.s32.totalorder %s18, 1
    %p267 = scmp.ne.s32.totalorder %s262, %s264
    %p268 = scmp.eq.s32.totalorder %s18, 0
    %p269 = por %p267, %p268
    %p270 = scmp.ne.s32.totalorder %s262, %s264
    %p271 = scmp.eq.s32.totalorder %s23, 1
    %p272 = por %p270, %p271
    %p273 = scmp.ne.s32.totalorder %s264, %s265
    %p274 = scmp.eq.s32.totalorder %s23, 0
    %p275 = por %p273, %p274
    %p276 = scmp.ne.s32.totalorder %s264, %s265
    %p277 = scmp.eq.s32.totalorder %s24, 1
    %p278 = por %p276, %p277
    %p280 = scmp.ne.s32.totalorder %s265, %s279
    %p281 = scmp.eq.s32.totalorder %s24, 0
    %p282 = por %p280, %p281
    %s283 = ssub.s32 %s18, %s25
    %p284 = scmp.eq.s32.totalorder %s283, 0
    %s286 = sadd.s32 %s285, 1
    %s287 = scalar_select %p284, %s285, %s286
    %p290 = pneg %p284
    %p291 = scmp.eq.s32.totalorder %s18, 1
    %p292 = por %p290, %p291
    %p293 = scmp.ne.s32.totalorder %s285, %s288
    %p294 = scmp.eq.s32.totalorder %s18, 0
    %p295 = por %p293, %p294
    %p296 = scmp.ne.s32.totalorder %s285, %s288
    %p297 = scmp.eq.s32.totalorder %s23, 1
    %p298 = por %p296, %p297
    %p299 = scmp.ne.s32.totalorder %s288, %s289
    %p300 = scmp.eq.s32.totalorder %s23, 0
    %p301 = por %p299, %p300
    %p302 = scmp.ne.s32.totalorder %s288, %s289
    %p303 = scmp.eq.s32.totalorder %s24, 1
    %p304 = por %p302, %p303
    %p306 = scmp.ne.s32.totalorder %s289, %s305
    %p307 = scmp.eq.s32.totalorder %s24, 0
    %p308 = por %p306, %p307
    %p309 = scmp.le.s32.totalorder 1, %s18
    %p310 = scmp.lt.s32.totalorder %s18, 3
    %p311 = pnand %p309, %p310
    %p312 = pneg %p311
    // Predicated region
    $region9: #{mistral_forward.3} parent=5 // pred_check
      _
    $region10: #{mistral_forward.3} parent=5 // pred_check_branch
      %314 = sbr.rel (%p311) target = $region12
    $region11: #{mistral_forward.3} parent=5 // pred_region
      %s315 = ssub.s32 %s18, 1
      // Predicated region
      $region13: #{mistral_forward.3} parent=11 // pred_check
        %p316 = pneg %p65
      $region14: #{mistral_forward.3} parent=11 // pred_check_branch
        %318 = sbr.rel (%p316) target = $region16
      $region15: #{mistral_forward.3} parent=11 // pred_region
        _
      $region16: #{mistral_forward.3} parent=11 // pred_fallthru
        _
      // Predicated region
      $region17: #{mistral_forward.3} parent=11 // pred_check
        %p319 = pneg %p86
      $region18: #{mistral_forward.3} parent=11 // pred_check_branch
        %321 = sbr.rel (%p319) target = $region20
      $region19: #{mistral_forward.3} parent=11 // pred_region
        _
      $region20: #{mistral_forward.3} parent=11 // pred_fallthru
        _
      // Predicated region
      $region21: #{mistral_forward.3} parent=11 // pred_check
        %p322 = pneg %p107
      $region22: #{mistral_forward.3} parent=11 // pred_check_branch
        %324 = sbr.rel (%p322) target = $region24
      $region23: #{mistral_forward.3} parent=11 // pred_region
        _
      $region24: #{mistral_forward.3} parent=11 // pred_fallthru
        _
      // Predicated region
      $region25: #{mistral_forward.3} parent=11 // pred_check
        %p325 = pneg %p128
      $region26: #{mistral_forward.3} parent=11 // pred_check_branch
        %327 = sbr.rel (%p325) target = $region28
      $region27: #{mistral_forward.3} parent=11 // pred_region
        _
      $region28: #{mistral_forward.3} parent=11 // pred_fallthru
        _
      // Predicated region
      $region29: #{mistral_forward.3} parent=11 // pred_check
        %p328 = pneg %p149
      $region30: #{mistral_forward.3} parent=11 // pred_check_branch
        %330 = sbr.rel (%p328) target = $region32
      $region31: #{mistral_forward.3} parent=11 // pred_region
        _
      $region32: #{mistral_forward.3} parent=11 // pred_fallthru
        _
      // Predicated region
      $region33: #{mistral_forward.3} parent=11 // pred_check
        %p331 = pneg %p170
      $region34: #{mistral_forward.3} parent=11 // pred_check_branch
        %333 = sbr.rel (%p331) target = $region36
      $region35: #{mistral_forward.3} parent=11 // pred_region
        _
      $region36: #{mistral_forward.3} parent=11 // pred_fallthru
        _
      // Predicated region
      $region37: #{mistral_forward.3} parent=11 // pred_check
        %p334 = pneg %p191
      $region38: #{mistral_forward.3} parent=11 // pred_check_branch
        %336 = sbr.rel (%p334) target = $region40
      $region39: #{mistral_forward.3} parent=11 // pred_region
        _
      $region40: #{mistral_forward.3} parent=11 // pred_fallthru
        _
      // Predicated region
      $region41: #{mistral_forward.3} parent=11 // pred_check
        %p337 = pneg %p212
      $region42: #{mistral_forward.3} parent=11 // pred_check_branch
        %339 = sbr.rel (%p337) target = $region44
      $region43: #{mistral_forward.3} parent=11 // pred_region
        _
      $region44: #{mistral_forward.3} parent=11 // pred_fallthru
        _
      // Predicated region
      $region45: #{mistral_forward.3} parent=11 // pred_check
        %p340 = pneg %p233
      $region46: #{mistral_forward.3} parent=11 // pred_check_branch
        %342 = sbr.rel (%p340) target = $region48
      $region47: #{mistral_forward.3} parent=11 // pred_region
        _
      $region48: #{mistral_forward.3} parent=11 // pred_fallthru
        _
      // Predicated region
      $region49: #{mistral_forward.3} parent=11 // pred_check
        %p343 = pneg %p254
      $region50: #{mistral_forward.3} parent=11 // pred_check_branch
        %345 = sbr.rel (%p343) target = $region52
      $region51: #{mistral_forward.3} parent=11 // pred_region
        _
      $region52: #{mistral_forward.3} parent=11 // pred_fallthru
        _
      // Predicated region
      $region53: #{mistral_forward.3} parent=11 // pred_check
        %p346 = pneg %p275
      $region54: #{mistral_forward.3} parent=11 // pred_check_branch
        %348 = sbr.rel (%p346) target = $region56
      $region55: #{mistral_forward.3} parent=11 // pred_region
        _
      $region56: #{mistral_forward.3} parent=11 // pred_fallthru
        _
    $region12: #{mistral_forward.3} parent=5 // pred_fallthru
      _
    %p349 = scmp.lt.s32.totalorder %s18, 2
    // Predicated region
    $region57: #{mistral_forward.3} parent=5 // pred_check
      %p350 = pneg %p349
    $region58: #{mistral_forward.3} parent=5 // pred_check_branch
      %352 = sbr.rel (%p350) target = $region60
    $region59: #{mistral_forward.3} parent=5 // pred_region
      // Predicated region
      $region61: #{mistral_forward.3} parent=59 // pred_check
        %p353 = pneg %p38
      $region62: #{mistral_forward.3} parent=59 // pred_check_branch
        %355 = sbr.rel (%p353) target = $region64
      $region63: #{mistral_forward.3} parent=59 // pred_region
        %p356 = scmp.lt.s32.totalorder %s18, 1
        %s357 = scalar_select %p356, %s18, 1
        %s358 = smul.addr %s357, 4
        %s359 = scalar_lea.vmem %s0, %s358
      $region64: #{mistral_forward.3} parent=59 // pred_fallthru
        _
    $region60: #{mistral_forward.3} parent=5 // pred_fallthru
      _
    %p360 = scmp.le.s32.totalorder 1, %s18
    %p361 = scmp.lt.s32.totalorder %s18, 3
    %p362 = pnand %p360, %p361
    %p363 = pneg %p362
    // Predicated region
    $region65: #{mistral_forward.3} parent=5 // pred_check
      _
    $region66: #{mistral_forward.3} parent=5 // pred_check_branch
      %365 = sbr.rel (%p362) target = $region68
    $region67: #{mistral_forward.3} parent=5 // pred_region
      %s366 = ssub.s32 %s18, 1
      %p367 = scmp.lt.s32.totalorder %s23, 1
      %s368 = scalar_select %p367, %s23, 1
      %s369 = smul.addr %s368, 4
      %s370 = scalar_lea.vmem %s0, %s369
      %p371 = pneg %p44
      %p372 = pneg %p41
      %p373 = pneg %p65
      %p374 = pneg %p62
      %p375 = pneg %p86
      %p376 = pneg %p83
      %p377 = pneg %p107
      %p378 = pneg %p104
      %p379 = pneg %p128
      %p380 = pneg %p125
      %p381 = pneg %p149
      %p382 = pneg %p146
      %p383 = pneg %p170
      %p384 = pneg %p167
      %p385 = pneg %p191
      %p386 = pneg %p188
      %p387 = pneg %p212
      %p388 = pneg %p209
      %p389 = pneg %p233
      %p390 = pneg %p230
      %p391 = pneg %p254
      %p392 = pneg %p251
      %p393 = pneg %p275
      %p394 = pneg %p272
      %p395 = pneg %p301
      %p396 = pneg %p298
      %p397 = scmp.lt.s32.totalorder %s23, 1
      %s398 = scalar_select %p397, %s23, 1
      %s399 = smul.addr %s398, 4
      %s400 = scalar_lea.vmem %s12, %s399
      %p401 = scmp.lt.s32.totalorder %s23, 1
      %s402 = scalar_select %p401, %s23, 1
      %s403 = smul.addr %s402, 4
      %s404 = scalar_lea.vmem %s0, %s403
      %p405 = scmp.lt.s32.totalorder %s23, 1
      %s406 = scalar_select %p405, %s23, 1
      %s407 = smul.addr %s406, 4
      %s408 = scalar_lea.vmem %s12, %s407
      %v410 = vld [vmem:[%s404] sm:$0xf]
      %v411 = vunpack.c.l.bf16 %v410
      %v412 = vld [vmem:[%s1] sm:$0x1]
      %v413 = vmul.f32 %v411, %v411
      %vm414 = vcmask 261120
      %v415 = vsel %vm414, %v413, 0.0
      %416 = vadd.xlane.f32.xlu0 %v415
      %v417 = vpop.xlane.xlu0 %416
      %v418 = vrcp.pop 32.0
      %v419 = vmul.f32 32.0, %v418
      %v420 = vsub.f32 1.0, %v419
      %v421 = vmul.f32 %v418, %v420
      %v422 = vadd.f32 %v418, %v421
      %vm423 = vweird.f32 %v418
      %v424 = vsel %vm423, %v418, %v422
      %v425 = vmul.f32 %v417, %v424
      %v426 = vadd.f32 %v425, 1e-05
      %v427 = vrsqrt.pop %v426
      %v428 = vmul.f32 %v427, %v426
      %v429 = vmul.f32 %v428, %v427
      %v430 = vmul.f32 0.5, %v429
      %v431 = vsub.f32 1.5, %v430
      %v432 = vmul.f32 %v427, %v431
      %vm433 = vweird.f32 %v426
      %vm434 = vweird.f32 %v427
      %vm435 = vmor %vm433, %vm434
      %v436 = vsel %vm435, %v427, %v432
      %v437 = vmul.f32 %v411, %v436
      %v439 = vperm.slane %v412, 0
      %v441 = vmul.f32 %v437, %v439
      %v442 = vpack.c.bf16 %v441, %v441
      %v443 = vld [vmem:[%s2] sm:$0xf]
      %v444 = vld [vmem:[%s2 + $0x4] sm:$0xf]
      %v445 = vld [vmem:[%s2 + $0x8] sm:$0xf]
      %v446 = vld [vmem:[%s2 + $0xc] sm:$0xf]
      %v451 = vunpack.c.l.b16 %v443
      %v452 = vunpack.c.l.b16 %v444
      %v453 = vunpack.c.l.b16 %v445
      %v454 = vunpack.c.l.b16 %v446
      %v455 = vpack.c.b16 %v452, %v451
      %v456 = vpack.c.b16 %v454, %v453
      %v460 = vsel %vm414, %v442, 0
      %462 = vmatpush.bf16.msra.mxu0 0
      %463 = vmatpush.bf16.msra.mxu0 0
      %464 = vmatpush.bf16.msra.mxu0 0
      %465 = vmatpush.bf16.msra.mxu0 0
      %466 = vmatpush.bf16.msra.mxu0 0
      %467 = vmatpush.bf16.msra.mxu0 0
      %468 = vmatpush.bf16.msra.mxu0 %v456
      %469 = vmatpush.bf16.msra.mxu0 %v455
      %470 = vmatmul.bf16.gmra.mxu0 %v460
      %v471 = vpop.f32.mrf.mxu0
      %v472 = vadd.f32 0.0, %v471
      %v473 = vpop.f32.mrf.mxu0
      %474 = vdwg.mxu0
      %v475 = vld [vmem:[%s3] sm:$0xf]
      %v476 = vld [vmem:[%s3 + $0x4] sm:$0xf]
      %v477 = vld [vmem:[%s3 + $0x8] sm:$0xf]
      %v478 = vld [vmem:[%s3 + $0xc] sm:$0xf]
      %v483 = vunpack.c.l.b16 %v475
      %v484 = vunpack.c.l.b16 %v476
      %v485 = vunpack.c.l.b16 %v477
      %v486 = vunpack.c.l.b16 %v478
      %v487 = vpack.c.b16 %v484, %v483
      %v488 = vpack.c.b16 %v486, %v485
      %491 = vmatpush.bf16.msra.mxu0 0
      %492 = vmatpush.bf16.msra.mxu0 0
      %493 = vmatpush.bf16.msra.mxu0 0
      %494 = vmatpush.bf16.msra.mxu0 0
      %495 = vmatpush.bf16.msra.mxu0 0
      %496 = vmatpush.bf16.msra.mxu0 0
      %497 = vmatpush.bf16.msra.mxu0 %v488
      %498 = vmatpush.bf16.msra.mxu0 %v487
      %499 = vmatmul.bf16.gmra.mxu0 %v460
      %v500 = vpop.f32.mrf.mxu0
      %v501 = vadd.f32 0.0, %v500
      %v502 = vpop.f32.mrf.mxu0
      %503 = vdwg.mxu0
      %v504 = vld [vmem:[%s4] sm:$0xf]
      %v505 = vld [vmem:[%s4 + $0x4] sm:$0xf]
      %v506 = vld [vmem:[%s4 + $0x8] sm:$0xf]
      %v507 = vld [vmem:[%s4 + $0xc] sm:$0xf]
      %v512 = vunpack.c.l.b16 %v504
      %v513 = vunpack.c.l.b16 %v505
      %v514 = vunpack.c.l.b16 %v506
      %v515 = vunpack.c.l.b16 %v507
      %v516 = vpack.c.b16 %v513, %v512
      %v517 = vpack.c.b16 %v515, %v514
      %520 = vmatpush.bf16.msra.mxu0 0
      %521 = vmatpush.bf16.msra.mxu0 0
      %522 = vmatpush.bf16.msra.mxu0 0
      %523 = vmatpush.bf16.msra.mxu0 0
      %524 = vmatpush.bf16.msra.mxu0 0
      %525 = vmatpush.bf16.msra.mxu0 0
      %526 = vmatpush.bf16.msra.mxu0 %v517
      %527 = vmatpush.bf16.msra.mxu0 %v516
      %528 = vmatmul.bf16.gmra.mxu0 %v460
      %v529 = vpop.f32.mrf.mxu0
      %v530 = vadd.f32 0.0, %v529
      %v531 = vpop.f32.mrf.mxu0
      %532 = vdwg.mxu0
      %v533 = vld [vmem:[%s10] sm:$0xff]
      %v535 = vrot.slane %v533, 1
      %v536 = vrot.slane %v533, 2
      %v537 = vrot.slane %v533, 3
      %v538 = vrot.slane %v533, 4
      %v539 = vrot.slane %v533, 5
      %v540 = vrot.slane %v533, 6
      %v541 = vrot.slane %v533, 7
      %v542 = vld [vmem:[%s11] sm:$0xff]
      %v544 = vrot.slane %v542, 1
      %v545 = vrot.slane %v542, 2
      %v546 = vrot.slane %v542, 3
      %v547 = vrot.slane %v542, 4
      %v548 = vrot.slane %v542, 5
      %v549 = vrot.slane %v542, 6
      %v550 = vrot.slane %v542, 7
      %552 = vrot.lane.b32.xlu0 %v472, 120
      %v553 = vpop.permute.xlu0 %552
      %555 = vrot.lane.b32.xlu0 %v472, 112
      %v556 = vpop.permute.xlu0 %555
      %558 = vrot.lane.b32.xlu0 %v472, 104
      %v559 = vpop.permute.xlu0 %558
      %v561 = vrot.slane %v556, 4
      %vm562 = vcmask 1047556
      %v563 = vsel %vm562, %v561, %v472
      %v564 = vrot.slane %v472, 4
      %v565 = vsel %vm562, %v556, %v564
      %v567 = vunpack.c.l.s4 1983009808
      %v568 = vunpack.c.0.s8 %v567
      %v569 = vperm.slane %v563, %v568
      %v571 = vunpack.c.l.s4 1983009808
      %v572 = vunpack.c.0.s8 %v571
      %v573 = vperm.slane %v565, %v572
      %v574 = vrot.slane %v559, 4
      %v575 = vsel %vm562, %v574, %v553
      %v576 = vrot.slane %v553, 4
      %v577 = vsel %vm562, %v559, %v576
      %v579 = vunpack.c.l.s4 1983009808
      %v580 = vunpack.c.0.s8 %v579
      %v581 = vperm.slane %v575, %v580
      %v583 = vunpack.c.l.s4 1983009808
      %v584 = vunpack.c.0.s8 %v583
      %v585 = vperm.slane %v577, %v584
      %v586 = vrot.slane %v581, 4
      %v587 = vsel %vm562, %v586, %v569
      %v588 = vrot.slane %v569, 4
      %v589 = vsel %vm562, %v581, %v588
      %v591 = vunpack.c.l.s4 1934713408
      %v592 = vunpack.c.0.s8 %v591
      %v593 = vperm.slane %v587, %v592
      %v595 = vunpack.c.l.s4 1934713408
      %v596 = vunpack.c.0.s8 %v595
      %v597 = vperm.slane %v589, %v596
      %v598 = vrot.slane %v585, 4
      %v599 = vsel %vm562, %v598, %v573
      %v600 = vrot.slane %v573, 4
      %v601 = vsel %vm562, %v585, %v600
      %v603 = vunpack.c.l.s4 1934713408
      %v604 = vunpack.c.0.s8 %v603
      %v605 = vperm.slane %v599, %v604
      %v607 = vunpack.c.l.s4 1934713408
      %v608 = vunpack.c.0.s8 %v607
      %v609 = vperm.slane %v601, %v608
      %v610 = vrot.slane %v593, 4
      %v611 = vsel %vm562, 0.0, %v610
      %v612 = vrot.slane %v597, 4
      %v613 = vsel %vm562, 0.0, %v612
      %v614 = vrot.slane %v605, 4
      %v615 = vsel %vm562, 0.0, %v614
      %v616 = vrot.slane %v609, 4
      %v617 = vsel %vm562, 0.0, %v616
      %v618 = vsub.f32 0.0, %v593
      %v619 = vsub.f32 0.0, %v611
      %v620 = vsub.f32 0.0, %v597
      %v621 = vsub.f32 0.0, %v613
      %v622 = vsub.f32 0.0, %v605
      %v623 = vsub.f32 0.0, %v615
      %v624 = vsub.f32 0.0, %v609
      %v625 = vsub.f32 0.0, %v617
      %634 = vrot.lane.b32.xlu0 %v618, 124
      %v635 = vpop.permute.xlu0 %634
      %636 = vrot.lane.b32.xlu0 %v619, 124
      %v637 = vpop.permute.xlu0 %636
      %638 = vrot.lane.b32.xlu0 %v620, 124
      %v639 = vpop.permute.xlu0 %638
      %640 = vrot.lane.b32.xlu0 %v621, 124
      %v641 = vpop.permute.xlu0 %640
      %642 = vrot.lane.b32.xlu0 %v622, 124
      %v643 = vpop.permute.xlu0 %642
      %644 = vrot.lane.b32.xlu0 %v623, 124
      %v645 = vpop.permute.xlu0 %644
      %646 = vrot.lane.b32.xlu0 %v624, 124
      %v647 = vpop.permute.xlu0 %646
      %648 = vrot.lane.b32.xlu0 %v625, 124
      %v649 = vpop.permute.xlu0 %648
      %666 = vrot.lane.b32.xlu0 %v593, 4
      %v667 = vpop.permute.xlu0 %666
      %668 = vrot.lane.b32.xlu0 %v611, 4
      %v669 = vpop.permute.xlu0 %668
      %670 = vrot.lane.b32.xlu0 %v597, 4
      %v671 = vpop.permute.xlu0 %670
      %672 = vrot.lane.b32.xlu0 %v613, 4
      %v673 = vpop.permute.xlu0 %672
      %674 = vrot.lane.b32.xlu0 %v605, 4
      %v675 = vpop.permute.xlu0 %674
      %676 = vrot.lane.b32.xlu0 %v615, 4
      %v677 = vpop.permute.xlu0 %676
      %678 = vrot.lane.b32.xlu0 %v609, 4
      %v679 = vpop.permute.xlu0 %678
      %680 = vrot.lane.b32.xlu0 %v617, 4
      %v681 = vpop.permute.xlu0 %680
      %vm690 = vcmask 31744
      %v691 = vsel %vm690, %v635, %v667
      %v692 = vsel %vm690, %v637, %v669
      %v693 = vsel %vm690, %v639, %v671
      %v694 = vsel %vm690, %v641, %v673
      %v695 = vsel %vm690, %v643, %v675
      %v696 = vsel %vm690, %v645, %v677
      %v697 = vsel %vm690, %v647, %v679
      %v698 = vsel %vm690, %v649, %v681
      %v699 = vperm.slane %v533, 0
      %v700 = vperm.slane %v535, 0
      %v701 = vperm.slane %v536, 0
      %v702 = vperm.slane %v537, 0
      %v703 = vperm.slane %v538, 0
      %v704 = vperm.slane %v539, 0
      %v705 = vperm.slane %v540, 0
      %v706 = vperm.slane %v541, 0
      %v715 = vmul.f32 %v593, %v699
      %v716 = vmul.f32 %v611, %v700
      %v717 = vmul.f32 %v597, %v701
      %v718 = vmul.f32 %v613, %v702
      %v719 = vmul.f32 %v605, %v703
      %v720 = vmul.f32 %v615, %v704
      %v721 = vmul.f32 %v609, %v705
      %v722 = vmul.f32 %v617, %v706
      %v723 = vperm.slane %v542, 0
      %v724 = vperm.slane %v544, 0
      %v725 = vperm.slane %v545, 0
      %v726 = vperm.slane %v546, 0
      %v727 = vperm.slane %v547, 0
      %v728 = vperm.slane %v548, 0
      %v729 = vperm.slane %v549, 0
      %v730 = vperm.slane %v550, 0
      %v739 = vmul.f32 %v691, %v723
      %v740 = vmul.f32 %v692, %v724
      %v741 = vmul.f32 %v693, %v725
      %v742 = vmul.f32 %v694, %v726
      %v743 = vmul.f32 %v695, %v727
      %v744 = vmul.f32 %v696, %v728
      %v745 = vmul.f32 %v697, %v729
      %v746 = vmul.f32 %v698, %v730
      %v747 = vadd.f32 %v715, %v739
      %v748 = vadd.f32 %v716, %v740
      %v749 = vadd.f32 %v717, %v741
      %v750 = vadd.f32 %v718, %v742
      %v751 = vadd.f32 %v719, %v743
      %v752 = vadd.f32 %v720, %v744
      %v753 = vadd.f32 %v721, %v745
      %v754 = vadd.f32 %v722, %v746
      %756 = vrot.lane.b32.xlu0 %v501, 120
      %v757 = vpop.permute.xlu0 %756
      %v759 = vrot.slane %v501, 4
      %v760 = vsel %vm562, 0.0, %v759
      %v762 = vunpack.c.l.s4 1983009808
      %v763 = vunpack.c.0.s8 %v762
      %v764 = vperm.slane %v501, %v763
      %v766 = vunpack.c.l.s4 1983009808
      %v767 = vunpack.c.0.s8 %v766
      %v768 = vperm.slane %v760, %v767
      %v769 = vrot.slane %v757, 4
      %v770 = vsel %vm562, 0.0, %v769
      %v772 = vunpack.c.l.s4 1983009808
      %v773 = vunpack.c.0.s8 %v772
      %v774 = vperm.slane %v757, %v773
      %v776 = vunpack.c.l.s4 1983009808
      %v777 = vunpack.c.0.s8 %v776
      %v778 = vperm.slane %v770, %v777
      %v779 = vrot.slane %v774, 4
      %v780 = vsel %vm562, %v779, %v764
      %v781 = vrot.slane %v764, 4
      %v782 = vsel %vm562, %v774, %v781
      %v784 = vunpack.c.l.s4 1934713408
      %v785 = vunpack.c.0.s8 %v784
      %v786 = vperm.slane %v780, %v785
      %v788 = vunpack.c.l.s4 1934713408
      %v789 = vunpack.c.0.s8 %v788
      %v790 = vperm.slane %v782, %v789
      %v791 = vrot.slane %v778, 4
      %v792 = vsel %vm562, %v791, %v768
      %v793 = vrot.slane %v768, 4
      %v794 = vsel %vm562, %v778, %v793
      %v796 = vunpack.c.l.s4 1934713408
      %v797 = vunpack.c.0.s8 %v796
      %v798 = vperm.slane %v792, %v797
      %v800 = vunpack.c.l.s4 1934713408
      %v801 = vunpack.c.0.s8 %v800
      %v802 = vperm.slane %v794, %v801
      %v803 = vrot.slane %v786, 4
      %v804 = vsel %vm562, 0.0, %v803
      %v805 = vrot.slane %v790, 4
      %v806 = vsel %vm562, 0.0, %v805
      %v807 = vrot.slane %v798, 4
      %v808 = vsel %vm562, 0.0, %v807
      %v809 = vrot.slane %v802, 4
      %v810 = vsel %vm562, 0.0, %v809
      %v811 = vsub.f32 0.0, %v786
      %v812 = vsub.f32 0.0, %v804
      %v813 = vsub.f32 0.0, %v790
      %v814 = vsub.f32 0.0, %v806
      %v815 = vsub.f32 0.0, %v798
      %v816 = vsub.f32 0.0, %v808
      %v817 = vsub.f32 0.0, %v802
      %v818 = vsub.f32 0.0, %v810
      %827 = vrot.lane.b32.xlu0 %v811, 124
      %v828 = vpop.permute.xlu0 %827
      %829 = vrot.lane.b32.xlu0 %v812, 124
      %v830 = vpop.permute.xlu0 %829
      %831 = vrot.lane.b32.xlu0 %v813, 124
      %v832 = vpop.permute.xlu0 %831
      %833 = vrot.lane.b32.xlu0 %v814, 124
      %v834 = vpop.permute.xlu0 %833
      %835 = vrot.lane.b32.xlu0 %v815, 124
      %v836 = vpop.permute.xlu0 %835
      %837 = vrot.lane.b32.xlu0 %v816, 124
      %v838 = vpop.permute.xlu0 %837
      %839 = vrot.lane.b32.xlu0 %v817, 124
      %v840 = vpop.permute.xlu0 %839
      %841 = vrot.lane.b32.xlu0 %v818, 124
      %v842 = vpop.permute.xlu0 %841
      %859 = vrot.lane.b32.xlu0 %v786, 4
      %v860 = vpop.permute.xlu0 %859
      %861 = vrot.lane.b32.xlu0 %v804, 4
      %v862 = vpop.permute.xlu0 %861
      %863 = vrot.lane.b32.xlu0 %v790, 4
      %v864 = vpop.permute.xlu0 %863
      %865 = vrot.lane.b32.xlu0 %v806, 4
      %v866 = vpop.permute.xlu0 %865
      %867 = vrot.lane.b32.xlu0 %v798, 4
      %v868 = vpop.permute.xlu0 %867
      %869 = vrot.lane.b32.xlu0 %v808, 4
      %v870 = vpop.permute.xlu0 %869
      %871 = vrot.lane.b32.xlu0 %v802, 4
      %v872 = vpop.permute.xlu0 %871
      %873 = vrot.lane.b32.xlu0 %v810, 4
      %v874 = vpop.permute.xlu0 %873
      %v883 = vsel %vm690, %v828, %v860
      %v884 = vsel %vm690, %v830, %v862
      %v885 = vsel %vm690, %v832, %v864
      %v886 = vsel %vm690, %v834, %v866
      %v887 = vsel %vm690, %v836, %v868
      %v888 = vsel %vm690, %v838, %v870
      %v889 = vsel %vm690, %v840, %v872
      %v890 = vsel %vm690, %v842, %v874
      %v891 = vmul.f32 %v786, %v699
      %v892 = vmul.f32 %v804, %v700
      %v893 = vmul.f32 %v790, %v701
      %v894 = vmul.f32 %v806, %v702
      %v895 = vmul.f32 %v798, %v703
      %v896 = vmul.f32 %v808, %v704
      %v897 = vmul.f32 %v802, %v705
      %v898 = vmul.f32 %v810, %v706
      %v899 = vmul.f32 %v883, %v723
      %v900 = vmul.f32 %v884, %v724
      %v901 = vmul.f32 %v885, %v725
      %v902 = vmul.f32 %v886, %v726
      %v903 = vmul.f32 %v887, %v727
      %v904 = vmul.f32 %v888, %v728
      %v905 = vmul.f32 %v889, %v729
      %v906 = vmul.f32 %v890, %v730
      %v907 = vadd.f32 %v891, %v899
      %v908 = vadd.f32 %v892, %v900
      %v909 = vadd.f32 %v893, %v901
      %v910 = vadd.f32 %v894, %v902
      %v911 = vadd.f32 %v895, %v903
      %v912 = vadd.f32 %v896, %v904
      %v913 = vadd.f32 %v897, %v905
      %v914 = vadd.f32 %v898, %v906
      %916 = vrot.lane.b32.xlu0 %v530, 120
      %v917 = vpop.permute.xlu0 %916
      %v919 = vrot.slane %v530, 4
      %v920 = vsel %vm562, 0.0, %v919
      %v922 = vunpack.c.l.s4 1983009808
      %v923 = vunpack.c.0.s8 %v922
      %v924 = vperm.slane %v530, %v923
      %v926 = vunpack.c.l.s4 1983009808
      %v927 = vunpack.c.0.s8 %v926
      %v928 = vperm.slane %v920, %v927
      %v929 = vrot.slane %v917, 4
      %v930 = vsel %vm562, 0.0, %v929
      %v932 = vunpack.c.l.s4 1983009808
      %v933 = vunpack.c.0.s8 %v932
      %v934 = vperm.slane %v917, %v933
      %v936 = vunpack.c.l.s4 1983009808
      %v937 = vunpack.c.0.s8 %v936
      %v938 = vperm.slane %v930, %v937
      %v939 = vrot.slane %v934, 4
      %v940 = vsel %vm562, %v939, %v924
      %v941 = vrot.slane %v924, 4
      %v942 = vsel %vm562, %v934, %v941
      %v944 = vunpack.c.l.s4 1934713408
      %v945 = vunpack.c.0.s8 %v944
      %v946 = vperm.slane %v940, %v945
      %v948 = vunpack.c.l.s4 1934713408
      %v949 = vunpack.c.0.s8 %v948
      %v950 = vperm.slane %v942, %v949
      %v951 = vrot.slane %v938, 4
      %v952 = vsel %vm562, %v951, %v928
      %v953 = vrot.slane %v928, 4
      %v954 = vsel %vm562, %v938, %v953
      %v956 = vunpack.c.l.s4 1934713408
      %v957 = vunpack.c.0.s8 %v956
      %v958 = vperm.slane %v952, %v957
      %v960 = vunpack.c.l.s4 1934713408
      %v961 = vunpack.c.0.s8 %v960
      %v962 = vperm.slane %v954, %v961
      %v963 = vrot.slane %v946, 4
      %v964 = vsel %vm562, 0.0, %v963
      %v965 = vrot.slane %v950, 4
      %v966 = vsel %vm562, 0.0, %v965
      %v967 = vrot.slane %v958, 4
      %v968 = vsel %vm562, 0.0, %v967
      %v969 = vrot.slane %v962, 4
      %v970 = vsel %vm562, 0.0, %v969
      %v971 = vrot.slane %v749, 4
      %v972 = vsel %vm562, %v971, %v747
      %v974 = vunpack.c.l.s4 1983009808
      %v975 = vunpack.c.0.s8 %v974
      %v976 = vperm.slane %v972, %v975
      %v977 = vrot.slane %v750, 4
      %v978 = vsel %vm562, %v977, %v748
      %v980 = vunpack.c.l.s4 1983009808
      %v981 = vunpack.c.0.s8 %v980
      %v982 = vperm.slane %v978, %v981
      %v983 = vrot.slane %v753, 4
      %v984 = vsel %vm562, %v983, %v751
      %v986 = vunpack.c.l.s4 1983009808
      %v987 = vunpack.c.0.s8 %v986
      %v988 = vperm.slane %v984, %v987
      %v989 = vrot.slane %v754, 4
      %v990 = vsel %vm562, %v989, %v752
      %v992 = vunpack.c.l.s4 1983009808
      %v993 = vunpack.c.0.s8 %v992
      %v994 = vperm.slane %v990, %v993
      %v995 = vrot.slane %v982, 4
      %v996 = vsel %vm562, %v995, %v976
      %v997 = vrot.slane %v976, 4
      %v998 = vsel %vm562, %v982, %v997
      %v1000 = vunpack.c.l.s4 1934713408
      %v1001 = vunpack.c.0.s8 %v1000
      %v1002 = vperm.slane %v996, %v1001
      %v1004 = vunpack.c.l.s4 1934713408
      %v1005 = vunpack.c.0.s8 %v1004
      %v1006 = vperm.slane %v998, %v1005
      %v1007 = vrot.slane %v994, 4
      %v1008 = vsel %vm562, %v1007, %v988
      %v1009 = vrot.slane %v988, 4
      %v1010 = vsel %vm562, %v994, %v1009
      %v1012 = vunpack.c.l.s4 1934713408
      %v1013 = vunpack.c.0.s8 %v1012
      %v1014 = vperm.slane %v1008, %v1013
      %v1016 = vunpack.c.l.s4 1934713408
      %v1017 = vunpack.c.0.s8 %v1016
      %v1018 = vperm.slane %v1010, %v1017
      %v1019 = vrot.slane %v1014, 4
      %v1020 = vsel %vm562, %v1019, %v1002
      %v1021 = vrot.slane %v1002, 4
      %v1022 = vsel %vm562, %v1014, %v1021
      %v1023 = vrot.slane %v1018, 4
      %v1024 = vsel %vm562, %v1023, %v1006
      %v1025 = vrot.slane %v1006, 4
      %v1026 = vsel %vm562, %v1018, %v1025
      %v1027 = vrot.slane %v909, 4
      %v1028 = vsel %vm562, %v1027, %v907
      %v1030 = vunpack.c.l.s4 1983009808
      %v1031 = vunpack.c.0.s8 %v1030
      %v1032 = vperm.slane %v1028, %v1031
      %v1033 = vrot.slane %v910, 4
      %v1034 = vsel %vm562, %v1033, %v908
      %v1036 = vunpack.c.l.s4 1983009808
      %v1037 = vunpack.c.0.s8 %v1036
      %v1038 = vperm.slane %v1034, %v1037
      %v1039 = vrot.slane %v913, 4
      %v1040 = vsel %vm562, %v1039, %v911
      %v1042 = vunpack.c.l.s4 1983009808
      %v1043 = vunpack.c.0.s8 %v1042
      %v1044 = vperm.slane %v1040, %v1043
      %v1045 = vrot.slane %v914, 4
      %v1046 = vsel %vm562, %v1045, %v912
      %v1048 = vunpack.c.l.s4 1983009808
      %v1049 = vunpack.c.0.s8 %v1048
      %v1050 = vperm.slane %v1046, %v1049
      %v1051 = vrot.slane %v1038, 4
      %v1052 = vsel %vm562, %v1051, %v1032
      %v1054 = vunpack.c.l.s4 1934713408
      %v1055 = vunpack.c.0.s8 %v1054
      %v1056 = vperm.slane %v1052, %v1055
      %v1057 = vrot.slane %v1050, 4
      %v1058 = vsel %vm562, %v1057, %v1044
      %v1060 = vunpack.c.l.s4 1934713408
      %v1061 = vunpack.c.0.s8 %v1060
      %v1062 = vperm.slane %v1058, %v1061
      %v1063 = vrot.slane %v1062, 4
      %v1064 = vsel %vm562, %v1063, %v1056
      %v1065 = vrot.slane %v1056, 4
      %v1066 = vsel %vm562, %v1062, %v1065
      %v1067 = vsel %vm562, %v965, %v946
      %v1069 = vunpack.c.l.s4 1983009808
      %v1070 = vunpack.c.0.s8 %v1069
      %v1071 = vperm.slane %v1067, %v1070
      %v1072 = vrot.slane %v966, 4
      %v1073 = vsel %vm562, %v1072, %v964
      %v1075 = vunpack.c.l.s4 1983009808
      %v1076 = vunpack.c.0.s8 %v1075
      %v1077 = vperm.slane %v1073, %v1076
      %v1078 = vsel %vm562, %v969, %v958
      %v1080 = vunpack.c.l.s4 1983009808
      %v1081 = vunpack.c.0.s8 %v1080
      %v1082 = vperm.slane %v1078, %v1081
      %v1083 = vrot.slane %v970, 4
      %v1084 = vsel %vm562, %v1083, %v968
      %v1086 = vunpack.c.l.s4 1983009808
      %v1087 = vunpack.c.0.s8 %v1086
      %v1088 = vperm.slane %v1084, %v1087
      %v1089 = vrot.slane %v1077, 4
      %v1090 = vsel %vm562, %v1089, %v1071
      %v1092 = vunpack.c.l.s4 1934713408
      %v1093 = vunpack.c.0.s8 %v1092
      %v1094 = vperm.slane %v1090, %v1093
      %v1095 = vrot.slane %v1088, 4
      %v1096 = vsel %vm562, %v1095, %v1082
      %v1098 = vunpack.c.l.s4 1934713408
      %v1099 = vunpack.c.0.s8 %v1098
      %v1100 = vperm.slane %v1096, %v1099
      %v1101 = vrot.slane %v1100, 4
      %v1102 = vsel %vm562, %v1101, %v1094
      %v1103 = vrot.slane %v1094, 4
      %v1104 = vsel %vm562, %v1100, %v1103
      %v1105 = vmul.f32 %v1020, 0.35355338
      %v1106 = vmul.f32 %v1022, 0.35355338
      %v1107 = vmul.f32 %v1024, 0.35355338
      %v1108 = vmul.f32 %v1026, 0.35355338
      %v1109 = vpack.c.bf16 %v1105, %v1105
      %v1110 = vpack.c.bf16 %v1106, %v1106
      %v1111 = vpack.c.bf16 %v1107, %v1107
      %v1112 = vpack.c.bf16 %v1108, %v1108
      %v1113 = vpack.c.bf16 %v1064, %v1064
      %v1114 = vpack.c.bf16 %v1066, %v1066
      %v1117 = vunpack.c.l.b16 %v1109
      %v1118 = vunpack.c.l.b16 %v1110
      %v1119 = vpack.c.b16 %v1118, %v1117
      %vm1120 = vcmask 64512
      %v1122 = vsel %vm1120, %v1119, 0
      %v1125 = vsel %vm1120, %v1113, 0
      %1127 = vmatpush.bf16.xpose.msra.mxu0 0
      %1128 = vmatpush.bf16.xpose.msra.mxu0 0
      %1129 = vmatpush.bf16.xpose.msra.mxu0 0
      %1130 = vmatpush.bf16.xpose.msra.mxu0 0
      %1131 = vmatpush.bf16.xpose.msra.mxu0 0
      %1132 = vmatpush.bf16.xpose.msra.mxu0 0
      %1133 = vmatpush.bf16.xpose.msra.mxu0 0
      %1134 = vmatpush.bf16.xpose.msra.mxu0 %v1125
      %1135 = vmatmul.bf16.gmra.mxu0 %v1122
      %v1136 = vpop.f32.mrf.mxu0
      %v1137 = vadd.f32 0.0, %v1136
      %v1138 = vpop.f32.mrf.mxu0
      %v1139 = vadd.f32 0.0, %v1138
      %1140 = vdwg.mxu0
      %v1143 = vunpack.c.l.b16 %v1111
      %v1144 = vunpack.c.l.b16 %v1112
      %v1145 = vpack.c.b16 %v1144, %v1143
      %v1147 = vsel %vm1120, %v1145, 0
      %v1150 = vsel %vm1120, %v1114, 0
      %1152 = vmatpush.bf16.xpose.msra.mxu0 0
      %1153 = vmatpush.bf16.xpose.msra.mxu0 0
      %1154 = vmatpush.bf16.xpose.msra.mxu0 0
      %1155 = vmatpush.bf16.xpose.msra.mxu0 0
      %1156 = vmatpush.bf16.xpose.msra.mxu0 0
      %1157 = vmatpush.bf16.xpose.msra.mxu0 0
      %1158 = vmatpush.bf16.xpose.msra.mxu0 0
      %1159 = vmatpush.bf16.xpose.msra.mxu0 %v1150
      %1160 = vmatmul.bf16.gmra.mxu0 %v1147
      %v1161 = vpop.f32.mrf.mxu0
      %v1162 = vadd.f32 0.0, %v1161
      %v1163 = vpop.f32.mrf.mxu0
      %v1164 = vadd.f32 0.0, %v1163
      %1165 = vdwg.mxu0
      %v1166 = vlaneseq
      %v1167 = vshrl.u32 %v1166, 7
      %v1168 = vlaneseq
      %v1169 = vand.u32 %v1168, 127
      %vm1170 = vcmp.le.s32.totalorder %v1169, %v1167
      %v1171 = vsel %vm1170, 1, 0
      %vm1172 = vcmp.eq.s32.totalorder %v1171, 1
      %v1173 = vsel %vm1172, %v1137, -1e+30
      %v1174 = vsel %vm1172, %v1139, -1e+30
      %v1175 = vsel %vm1172, %v1162, -1e+30
      %v1176 = vsel %vm1172, %v1164, -1e+30
      %v1177 = vsel %vm1120, %v1173, -inf
      %1178 = vmax.xlane.f32.xlu0 %v1177
      %v1179 = vpop.xlane.xlu0 %1178
      %v1180 = vsel %vm1120, %v1174, -inf
      %1181 = vmax.xlane.f32.xlu0 %v1180
      %v1182 = vpop.xlane.xlu0 %1181
      %v1183 = vsel %vm1120, %v1175, -inf
      %1184 = vmax.xlane.f32.xlu0 %v1183
      %v1185 = vpop.xlane.xlu0 %1184
      %v1186 = vsel %vm1120, %v1176, -inf
      %1187 = vmax.xlane.f32.xlu0 %v1186
      %v1188 = vpop.xlane.xlu0 %1187
      %v1189 = vsub.f32 %v1173, %v1179
      %v1190 = vsub.f32 %v1174, %v1182
      %v1191 = vsub.f32 %v1175, %v1185
      %v1192 = vsub.f32 %v1176, %v1188
      %v1193 = vmul.f32 %v1189, 1.442695
      %v1194 = vpow.pop %v1193
      %v1195 = vmul.f32 %v1190, 1.442695
      %v1196 = vpow.pop %v1195
      %v1197 = vmul.f32 %v1191, 1.442695
      %v1198 = vpow.pop %v1197
      %v1199 = vmul.f32 %v1192, 1.442695
      %v1200 = vpow.pop %v1199
      %v1201 = vsel %vm1120, %v1194, 0.0
      %1202 = vadd.xlane.f32.xlu0 %v1201
      %v1203 = vpop.xlane.xlu0 %1202
      %v1204 = vsel %vm1120, %v1196, 0.0
      %1205 = vadd.xlane.f32.xlu0 %v1204
      %v1206 = vpop.xlane.xlu0 %1205
      %v1207 = vsel %vm1120, %v1198, 0.0
      %1208 = vadd.xlane.f32.xlu0 %v1207
      %v1209 = vpop.xlane.xlu0 %1208
      %v1210 = vsel %vm1120, %v1200, 0.0
      %1211 = vadd.xlane.f32.xlu0 %v1210
      %v1212 = vpop.xlane.xlu0 %1211
      %v1213 = vrcp.pop %v1203
      %v1214 = vrcp.pop %v1206
      %v1215 = vrcp.pop %v1209
      %v1216 = vrcp.pop %v1212
      %v1217 = vmul.f32 %v1194, %v1213
      %v1218 = vmul.f32 %v1196, %v1214
      %v1219 = vmul.f32 %v1198, %v1215
      %v1220 = vmul.f32 %v1200, %v1216
      %v1221 = vpack.c.bf16 %v1217, %v1217
      %v1222 = vpack.c.bf16 %v1218, %v1218
      %v1223 = vpack.c.bf16 %v1219, %v1219
      %v1224 = vpack.c.bf16 %v1220, %v1220
      %v1225 = vpack.c.bf16 %v1102, %v1102
      %v1226 = vpack.c.bf16 %v1104, %v1104
      %v1229 = vunpack.c.l.b16 %v1221
      %v1230 = vunpack.c.l.b16 %v1222
      %v1231 = vpack.c.b16 %v1230, %v1229
      %v1233 = vsel %vm1120, %v1231, 0
      %vm1235 = vcmask 1043456
      %v1237 = vsel %vm1235, %v1225, 0
      %1239 = vmatpush.bf16.msra.mxu0 0
      %1240 = vmatpush.bf16.msra.mxu0 0
      %1241 = vmatpush.bf16.msra.mxu0 0
      %1242 = vmatpush.bf16.msra.mxu0 0
      %1243 = vmatpush.bf16.msra.mxu0 0
      %1244 = vmatpush.bf16.msra.mxu0 0
      %1245 = vmatpush.bf16.msra.mxu0 0
      %1246 = vmatpush.bf16.msra.mxu0 %v1237
      %1247 = vmatmul.bf16.gmra.mxu0 %v1233
      %v1248 = vpop.f32.mrf.mxu0
      %v1249 = vadd.f32 0.0, %v1248
      %v1250 = vpop.f32.mrf.mxu0
      %v1251 = vadd.f32 0.0, %v1250
      %1252 = vdwg.mxu0
      %v1255 = vunpack.c.l.b16 %v1223
      %v1256 = vunpack.c.l.b16 %v1224
      %v1257 = vpack.c.b16 %v1256, %v1255
      %v1259 = vsel %vm1120, %v1257, 0
      %v1262 = vsel %vm1235, %v1226, 0
      %1264 = vmatpush.bf16.msra.mxu0 0
      %1265 = vmatpush.bf16.msra.mxu0 0
      %1266 = vmatpush.bf16.msra.mxu0 0
      %1267 = vmatpush.bf16.msra.mxu0 0
      %1268 = vmatpush.bf16.msra.mxu0 0
      %1269 = vmatpush.bf16.msra.mxu0 0
      %1270 = vmatpush.bf16.msra.mxu0 0
      %1271 = vmatpush.bf16.msra.mxu0 %v1262
      %1272 = vmatmul.bf16.gmra.mxu0 %v1259
      %v1273 = vpop.f32.mrf.mxu0
      %v1274 = vadd.f32 0.0, %v1273
      %v1275 = vpop.f32.mrf.mxu0
      %v1276 = vadd.f32 0.0, %v1275
      %1277 = vdwg.mxu0
      %v1278 = vrot.slane %v1274, 4
      %v1279 = vsel %vm562, %v1278, %v1249
      %v1280 = vrot.slane %v1249, 4
      %v1281 = vsel %vm562, %v1274, %v1280
      %v1283 = vunpack.c.l.s4 1983009808
      %v1284 = vunpack.c.0.s8 %v1283
      %v1285 = vperm.slane %v1279, %v1284
      %v1287 = vunpack.c.l.s4 1983009808
      %v1288 = vunpack.c.0.s8 %v1287
      %v1289 = vperm.slane %v1281, %v1288
      %v1290 = vrot.slane %v1276, 4
      %v1291 = vsel %vm562, %v1290, %v1251
      %v1292 = vrot.slane %v1251, 4
      %v1293 = vsel %vm562, %v1276, %v1292
      %v1295 = vunpack.c.l.s4 1983009808
      %v1296 = vunpack.c.0.s8 %v1295
      %v1297 = vperm.slane %v1291, %v1296
      %v1299 = vunpack.c.l.s4 1983009808
      %v1300 = vunpack.c.0.s8 %v1299
      %v1301 = vperm.slane %v1293, %v1300
      %v1302 = vrot.slane %v1297, 4
      %v1303 = vsel %vm562, %v1302, %v1285
      %v1304 = vrot.slane %v1285, 4
      %v1305 = vsel %vm562, %v1297, %v1304
      %v1307 = vunpack.c.l.s4 1934713408
      %v1308 = vunpack.c.0.s8 %v1307
      %v1309 = vperm.slane %v1303, %v1308
      %v1311 = vunpack.c.l.s4 1934713408
      %v1312 = vunpack.c.0.s8 %v1311
      %v1313 = vperm.slane %v1305, %v1312
      %v1314 = vrot.slane %v1301, 4
      %v1315 = vsel %vm562, %v1314, %v1289
      %v1316 = vrot.slane %v1289, 4
      %v1317 = vsel %vm562, %v1301, %v1316
      %v1319 = vunpack.c.l.s4 1934713408
      %v1320 = vunpack.c.0.s8 %v1319
      %v1321 = vperm.slane %v1315, %v1320
      %v1323 = vunpack.c.l.s4 1934713408
      %v1324 = vunpack.c.0.s8 %v1323
      %v1325 = vperm.slane %v1317, %v1324
      %v1326 = vrot.slane %v1309, 4
      %v1327 = vsel %vm562, 0.0, %v1326
      %v1328 = vrot.slane %v1313, 4
      %v1329 = vsel %vm562, 0.0, %v1328
      %v1330 = vrot.slane %v1321, 4
      %v1331 = vsel %vm562, 0.0, %v1330
      %v1332 = vrot.slane %v1325, 4
      %v1333 = vsel %vm562, 0.0, %v1332
      %v1334 = vsel %vm562, %v1328, %v1309
      %v1336 = vunpack.c.l.s4 1983009808
      %v1337 = vunpack.c.0.s8 %v1336
      %v1338 = vperm.slane %v1334, %v1337
      %v1339 = vrot.slane %v1329, 4
      %v1340 = vsel %vm562, %v1339, %v1327
      %v1342 = vunpack.c.l.s4 1983009808
      %v1343 = vunpack.c.0.s8 %v1342
      %v1344 = vperm.slane %v1340, %v1343
      %v1345 = vsel %vm562, %v1332, %v1321
      %v1347 = vunpack.c.l.s4 1983009808
      %v1348 = vunpack.c.0.s8 %v1347
      %v1349 = vperm.slane %v1345, %v1348
      %v1350 = vrot.slane %v1333, 4
      %v1351 = vsel %vm562, %v1350, %v1331
      %v1353 = vunpack.c.l.s4 1983009808
      %v1354 = vunpack.c.0.s8 %v1353
      %v1355 = vperm.slane %v1351, %v1354
      %v1356 = vrot.slane %v1344, 4
      %v1357 = vsel %vm562, %v1356, %v1338
      %v1358 = vrot.slane %v1338, 4
      %v1359 = vsel %vm562, %v1344, %v1358
      %v1361 = vunpack.c.l.s4 1934713408
      %v1362 = vunpack.c.0.s8 %v1361
      %v1363 = vperm.slane %v1357, %v1362
      %v1365 = vunpack.c.l.s4 1934713408
      %v1366 = vunpack.c.0.s8 %v1365
      %v1367 = vperm.slane %v1359, %v1366
      %v1368 = vrot.slane %v1355, 4
      %v1369 = vsel %vm562, %v1368, %v1349
      %v1370 = vrot.slane %v1349, 4
      %v1371 = vsel %vm562, %v1355, %v1370
      %v1373 = vunpack.c.l.s4 1934713408
      %v1374 = vunpack.c.0.s8 %v1373
      %v1375 = vperm.slane %v1369, %v1374
      %v1377 = vunpack.c.l.s4 1934713408
      %v1378 = vunpack.c.0.s8 %v1377
      %v1379 = vperm.slane %v1371, %v1378
      %v1380 = vrot.slane %v1375, 4
      %v1381 = vsel %vm562, %v1380, %v1363
      %v1382 = vrot.slane %v1363, 4
      %v1383 = vsel %vm562, %v1375, %v1382
      %v1384 = vrot.slane %v1379, 4
      %v1385 = vsel %vm562, %v1384, %v1367
      %v1386 = vrot.slane %v1367, 4
      %v1387 = vsel %vm562, %v1379, %v1386
      %1389 = vrot.lane.b32.xlu0 %v1383, 8
      %v1390 = vpop.permute.xlu0 %1389
      %1393 = vrot.lane.b32.xlu0 %v1385, 16
      %v1394 = vpop.permute.xlu0 %1393
      %1397 = vrot.lane.b32.xlu0 %v1387, 24
      %v1398 = vpop.permute.xlu0 %1397
      %v1400 = vsel %vm1120, %v1381, %v1390
      %vm1401 = vcmask 130048
      %v1402 = vsel %vm1401, %v1400, %v1394
      %vm1403 = vcmask 195584
      %v1404 = vsel %vm1403, %v1402, %v1398
      %v1405 = vpack.c.bf16 %v1404, %v1404
      %v1406 = vld [vmem:[%s5] sm:$0xf]
      %v1407 = vld [vmem:[%s5 + $0x4] sm:$0xf]
      %v1408 = vld [vmem:[%s5 + $0x8] sm:$0xf]
      %v1409 = vld [vmem:[%s5 + $0xc] sm:$0xf]
      %v1414 = vunpack.c.l.b16 %v1406
      %v1415 = vunpack.c.l.b16 %v1407
      %v1416 = vunpack.c.l.b16 %v1408
      %v1417 = vunpack.c.l.b16 %v1409
      %v1418 = vpack.c.b16 %v1415, %v1414
      %v1419 = vpack.c.b16 %v1417, %v1416
      %v1423 = vsel %vm414, %v1405, 0
      %1425 = vmatpush.bf16.msra.mxu0 0
      %1426 = vmatpush.bf16.msra.mxu0 0
      %1427 = vmatpush.bf16.msra.mxu0 0
      %1428 = vmatpush.bf16.msra.mxu0 0
      %1429 = vmatpush.bf16.msra.mxu0 0
      %1430 = vmatpush.bf16.msra.mxu0 0
      %1431 = vmatpush.bf16.msra.mxu0 %v1419
      %1432 = vmatpush.bf16.msra.mxu0 %v1418
      %1433 = vmatmul.bf16.gmra.mxu0 %v1423
      %v1434 = vpop.f32.mrf.mxu0
      %v1435 = vadd.f32 0.0, %v1434
      %v1436 = vpop.f32.mrf.mxu0
      %1437 = vdwg.mxu0
      %v1438 = vadd.f32 %v411, %v1435
      %v1439 = vld [vmem:[%s6] sm:$0x1]
      %v1440 = vmul.f32 %v1438, %v1438
      %v1441 = vsel %vm414, %v1440, 0.0
      %1442 = vadd.xlane.f32.xlu0 %v1441
      %v1443 = vpop.xlane.xlu0 %1442
      %v1444 = vmul.f32 %v1443, %v424
      %v1445 = vadd.f32 %v1444, 1e-05
      %v1446 = vrsqrt.pop %v1445
      %v1447 = vmul.f32 %v1446, %v1445
      %v1448 = vmul.f32 %v1447, %v1446
      %v1449 = vmul.f32 0.5, %v1448
      %v1450 = vsub.f32 1.5, %v1449
      %v1451 = vmul.f32 %v1446, %v1450
      %vm1452 = vweird.f32 %v1445
      %vm1453 = vweird.f32 %v1446
      %vm1454 = vmor %vm1452, %vm1453
      %v1455 = vsel %vm1454, %v1446, %v1451
      %v1456 = vmul.f32 %v1438, %v1455
      %v1458 = vperm.slane %v1439, 0
      %v1460 = vmul.f32 %v1456, %v1458
      %v1461 = vpack.c.bf16 %v1460, %v1460
      %v1462 = vld [vmem:[%s7] sm:$0xf]
      %v1463 = vld [vmem:[%s7 + $0x4] sm:$0xf]
      %v1464 = vld [vmem:[%s7 + $0x8] sm:$0xf]
      %v1465 = vld [vmem:[%s7 + $0xc] sm:$0xf]
      %v1470 = vunpack.c.l.b16 %v1462
      %v1471 = vunpack.c.l.b16 %v1463
      %v1472 = vunpack.c.l.b16 %v1464
      %v1473 = vunpack.c.l.b16 %v1465
      %v1474 = vpack.c.b16 %v1471, %v1470
      %v1475 = vpack.c.b16 %v1473, %v1472
      %v1479 = vsel %vm414, %v1461, 0
      %1481 = vmatpush.bf16.msra.mxu0 0
      %1482 = vmatpush.bf16.msra.mxu0 0
      %1483 = vmatpush.bf16.msra.mxu0 0
      %1484 = vmatpush.bf16.msra.mxu0 0
      %1485 = vmatpush.bf16.msra.mxu0 0
      %1486 = vmatpush.bf16.msra.mxu0 0
      %1487 = vmatpush.bf16.msra.mxu0 %v1475
      %1488 = vmatpush.bf16.msra.mxu0 %v1474
      %1489 = vmatmul.bf16.gmra.mxu0 %v1479
      %v1490 = vpop.f32.mrf.mxu0
      %v1491 = vadd.f32 0.0, %v1490
      %v1492 = vpop.f32.mrf.mxu0
      %1493 = vdwg.mxu0
      %v1494 = vld [vmem:[%s8] sm:$0xf]
      %v1495 = vld [vmem:[%s8 + $0x4] sm:$0xf]
      %v1496 = vld [vmem:[%s8 + $0x8] sm:$0xf]
      %v1497 = vld [vmem:[%s8 + $0xc] sm:$0xf]
      %v1502 = vunpack.c.l.b16 %v1494
      %v1503 = vunpack.c.l.b16 %v1495
      %v1504 = vunpack.c.l.b16 %v1496
      %v1505 = vunpack.c.l.b16 %v1497
      %v1506 = vpack.c.b16 %v1503, %v1502
      %v1507 = vpack.c.b16 %v1505, %v1504
      %1510 = vmatpush.bf16.msra.mxu0 0
      %1511 = vmatpush.bf16.msra.mxu0 0
      %1512 = vmatpush.bf16.msra.mxu0 0
      %1513 = vmatpush.bf16.msra.mxu0 0
      %1514 = vmatpush.bf16.msra.mxu0 0
      %1515 = vmatpush.bf16.msra.mxu0 0
      %1516 = vmatpush.bf16.msra.mxu0 %v1507
      %1517 = vmatpush.bf16.msra.mxu0 %v1506
      %1518 = vmatmul.bf16.gmra.mxu0 %v1479
      %v1519 = vpop.f32.mrf.mxu0
      %v1520 = vadd.f32 0.0, %v1519
      %v1521 = vpop.f32.mrf.mxu0
      %1522 = vdwg.mxu0
      %v1523 = vxor.u32 %v1491, 2147483648
      %v1524 = vmul.f32 %v1523, 1.442695
      %v1525 = vpow.pop %v1524
      %v1526 = vadd.f32 %v1525, 1.0
      %v1527 = vrcp.pop %v1526
      %v1528 = vmul.f32 %v1526, %v1527
      %v1529 = vsub.f32 1.0, %v1528
      %v1530 = vmul.f32 %v1527, %v1529
      %v1531 = vadd.f32 %v1527, %v1530
      %vm1532 = vweird.f32 %v1526
      %vm1533 = vweird.f32 %v1527
      %vm1534 = vmor %vm1532, %vm1533
      %v1535 = vsel %vm1534, %v1527, %v1531
      %v1536 = vand.u32 2147483647, %v1526
      %vm1537 = vcmp.eq.f32.partialorder %v1536, 8.507059e+37
      %v1538 = vand.u32 %v1526, 2147483648
      %v1539 = vor.u32 1.1754944e-38, %v1538
      %v1540 = vsel %vm1537, %v1539, %v1535
      %v1541 = vmul.f32 1.0, %v1540
      %v1542 = vmul.f32 %v1491, %v1541
      %v1543 = vmul.f32 %v1542, %v1520
      %v1544 = vpack.c.bf16 %v1543, %v1543
      %v1545 = vld [vmem:[%s9] sm:$0xf]
      %v1546 = vld [vmem:[%s9 + $0x4] sm:$0xf]
      %v1547 = vld [vmem:[%s9 + $0x8] sm:$0xf]
      %v1548 = vld [vmem:[%s9 + $0xc] sm:$0xf]
      %v1549 = vld [vmem:[%s9 + $0x10] sm:$0xf]
      %v1550 = vld [vmem:[%s9 + $0x14] sm:$0xf]
      %v1551 = vld [vmem:[%s9 + $0x18] sm:$0xf]
      %v1552 = vld [vmem:[%s9 + $0x1c] sm:$0xf]
      %v1561 = vunpack.c.l.b16 %v1545
      %v1562 = vunpack.c.l.b16 %v1546
      %v1563 = vunpack.c.l.b16 %v1547
      %v1564 = vunpack.c.l.b16 %v1548
      %v1565 = vunpack.c.l.b16 %v1549
      %v1566 = vunpack.c.l.b16 %v1550
      %v1567 = vunpack.c.l.b16 %v1551
      %v1568 = vunpack.c.l.b16 %v1552
      %v1569 = vpack.c.b16 %v1562, %v1561
      %v1570 = vpack.c.b16 %v1564, %v1563
      %v1571 = vpack.c.b16 %v1566, %v1565
      %v1572 = vpack.c.b16 %v1568, %v1567
      %vm1577 = vcmask 523264
      %v1579 = vsel %vm1577, %v1544, 0
      %1581 = vmatpush.bf16.msra.mxu0 0
      %1582 = vmatpush.bf16.msra.mxu0 0
      %1583 = vmatpush.bf16.msra.mxu0 0
      %1584 = vmatpush.bf16.msra.mxu0 0
      %1585 = vmatpush.bf16.msra.mxu0 %v1572
      %1586 = vmatpush.bf16.msra.mxu0 %v1571
      %1587 = vmatpush.bf16.msra.mxu0 %v1570
      %1588 = vmatpush.bf16.msra.mxu0 %v1569
      %1589 = vmatmul.bf16.gmra.mxu0 %v1579
      %v1590 = vpop.f32.mrf.mxu0
      %v1591 = vadd.f32 0.0, %v1590
      %v1592 = vpop.f32.mrf.mxu0
      %1593 = vdwg.mxu0
      %v1594 = vadd.f32 %v1438, %v1591
      %v1595 = vpack.c.bf16 %v1594, %v1594
      %vm1596 = vcmask 257024
      %1597 = vst.msk [vmem:[%s408] sm:$0xf] %vm1596, %v1595
      %p1598 = scmp.lt.s32.totalorder %s23, 1
      %s1599 = scalar_select %p1598, %s23, 1
      %s1600 = smul.addr %s1599, 4
      %s1601 = scalar_lea.vmem %s12, %s1600
      // Predicated region
      $region69: #{mistral_forward.3} parent=67 // pred_check
        %p1602 = pneg %p298
      $region70: #{mistral_forward.3} parent=67 // pred_check_branch
        %1604 = sbr.rel (%p1602) target = $region72
      $region71: #{mistral_forward.3} parent=67 // pred_region
        _
      $region72: #{mistral_forward.3} parent=67 // pred_fallthru
        _
    $region68: #{mistral_forward.3} parent=5 // pred_fallthru
      _
    %p1605 = scmp.le.s32.totalorder 2, %s18
    // Predicated region
    $region73: #{mistral_forward.3} parent=5 // pred_check
      %p1606 = pneg %p1605
    $region74: #{mistral_forward.3} parent=5 // pred_check_branch
      %1608 = sbr.rel (%p1606) target = $region76
    $region75: #{mistral_forward.3} parent=5 // pred_region
      %s1609 = ssub.s32 %s18, 2
      // Predicated region
      $region77: #{mistral_forward.3} parent=75 // pred_check
        %p1610 = pneg %p304
      $region78: #{mistral_forward.3} parent=75 // pred_check_branch
        %1612 = sbr.rel (%p1610) target = $region80
      $region79: #{mistral_forward.3} parent=75 // pred_region
        %p1613 = scmp.lt.s32.totalorder %s24, 1
        %s1614 = scalar_select %p1613, %s24, 1
        %s1615 = smul.addr %s1614, 4
        %s1616 = scalar_lea.vmem %s12, %s1615
      $region80: #{mistral_forward.3} parent=75 // pred_fallthru
        _
    $region76: #{mistral_forward.3} parent=5 // pred_fallthru
      _
  $region6: #{mistral_forward.3} parent=0 // loop_footer
    %s22 = sadd.s32 1, %s18
  $region7: #{mistral_forward.3} parent=0 // loop_footer_branch
    %17 = sbr.rel target = $region3
  $region8: #{mistral_forward.3} parent=0 // loop_exit
    _

</llo_original>
